<compile_context>
chip_gen: v7x
topology: tpu7x:2x2x1
jax: 0.10.0
libtpu: 0.0.40
codegen_flags: <defaults>
</compile_context>

<pallas_src>
import functools

import numpy as np
import jax
import jax.numpy as jnp
from jax import lax
from jax.experimental import pallas as pl
from jax.experimental.pallas import tpu as pltpu


def _cross_attention_kernel(f1_ref, f2_ref, w_c_ref, w_2c_ref, b_ref, out_ref,
                            *, nhead, dims, block_b, add_residual):
    f32 = jnp.float32
    bf16 = jnp.bfloat16
    C = nhead * dims

    # Loop-invariant parameter views (static, sublane-aligned slab slices).
    w_q = w_c_ref[0:C, :]             # (C, C)   bf16, head-grouped rows, pre-scaled by 1/sqrt(dims)
    w_kv = w_c_ref[C:3 * C, :]        # (2C, C)  bf16, k rows then v rows (head-grouped)
    w_m1 = w_2c_ref[0:2 * C, :]       # (2C, 2C) bf16, mlp[0] with self.conv folded into its right half
    w_m2 = w_2c_ref[2 * C:3 * C, :]   # (C, 2C)  bf16, mlp[3]
    b_q = b_ref[0:C, :]               # (C, 1)   f32, pre-scaled
    b_kv = b_ref[C:3 * C, :]          # (2C, 1)
    b_m1 = b_ref[3 * C:5 * C, :]      # (2C, 1)  with self.conv bias folded in
    b_m2 = b_ref[5 * C:6 * C, :]      # (C, 1)

    qk_dims = (((1,), (1,)), ((0,), (0,)))   # contract d, batch h -> (h, N, M)
    pv_dims = (((2,), (2,)), ((0,), (0,)))   # contract m, batch h -> (h, d, N)

    def per_item(b):
        x1 = f1_ref[b]                       # (C, N) bf16
        x2 = f2_ref[b]                       # (C, M) bf16

        # q conv and fused (k, v) conv: bf16 MXU, f32 accumulation.
        q = jnp.dot(w_q, x1, preferred_element_type=f32) + b_q        # (C, N)
        kv = jnp.dot(w_kv, x2, preferred_element_type=f32) + b_kv     # (2C, M)

        # Multi-head attention, batched over heads (head-contiguous channels).
        q3 = q.reshape(nhead, dims, -1).astype(bf16)                  # (h, d, N)
        k3 = kv[:C, :].reshape(nhead, dims, -1).astype(bf16)          # (h, d, M)
        v3 = kv[C:, :].reshape(nhead, dims, -1).astype(bf16)          # (h, d, M)

        # TODO(synk): for production point counts (N, M in the thousands) switch
        # to an M-streamed online-softmax loop so (h, N, M) never materializes
        # (first thing to break on v7x's 64 MiB VMEM), and pad/mask N, M to
        # multiples of 128 for lane-dense stores.
        scores = lax.dot_general(q3, k3, qk_dims,
                                 preferred_element_type=f32)          # (h, N, M) f32
        scores = scores - jnp.max(scores, axis=-1, keepdims=True)
        p = jnp.exp(scores)
        l = jnp.sum(p, axis=-1)                                       # (h, N) f32
        fh = lax.dot_general(v3, p.astype(bf16), pv_dims,
                             preferred_element_type=f32)              # (h, d, N) f32
        # Normalize AFTER the PV matmul: h*d*N multiplies instead of h*N*M.
        fh = fh * pl.reciprocal(l, approx=True)[:, None, :]
        feats_g = fh.reshape(C, -1).astype(bf16)                      # (C, N) head-grouped

        # mlp: Conv1d(2C,2C,1) [with self.conv folded in] on cat([x1, feats_g])
        #      -> InstanceNorm1d -> ReLU -> Conv1d(2C,C,1).
        cat = jnp.concatenate([x1, feats_g], axis=0)                  # (2C, N) bf16
        hid = jnp.dot(w_m1, cat, preferred_element_type=f32) + b_m1   # (2C, N) f32

        inv_n = 1.0 / hid.shape[1]
        mean = jnp.sum(hid, axis=1, keepdims=True) * inv_n
        ex2 = jnp.sum(hid * hid, axis=1, keepdims=True) * inv_n
        var = jnp.maximum(ex2 - mean * mean, 0.0)    # biased var (PyTorch), one pass
        hid = (hid - mean) * lax.rsqrt(var + 1e-5)   # InstanceNorm1d, affine=False
        hid = jnp.maximum(hid, 0.0)                  # ReLU

        out = jnp.dot(w_m2, hid.astype(bf16), preferred_element_type=f32) + b_m2
        if add_residual:                             # fused x + block(x, y)
            out = out + x1.astype(f32)
        out_ref[b] = out.astype(out_ref.dtype)

    if block_b == 1:
        per_item(0)
    else:
        # fori_loop (not a Python unroll): one batch item's intermediates are
        # live at a time, bounding vreg/VMEM pressure at larger block_b.
        def body(b, carry):
            per_item(b)
            return carry

        lax.fori_loop(0, block_b, body, 0)


def _pick_block_b(B, max_block=8):
    """Largest batch block <= max_block giving an even number (>=2) of grid steps.

    Even step counts keep both v7x TensorCores load-balanced; larger blocks
    amortize the ~0.35 us per grid step on single-TC v5e/v6e.
    """
    best = 1
    for d in range(1, min(max_block, B) + 1):
        if B % d:
            continue
        steps = B // d
        if steps >= 2 and steps % 2 == 0:
            best = d
    if best == 1 and B > max_block:
        for d in range(min(max_block, B // 2), 0, -1):
            if B % d == 0:
                return d
    return best


def _vmem_limit_bytes():
    """Generation-aware VMEM limit: <= ~48 MiB on v7x (64 MiB VMEM), up to 96 MiB on v5e/v6e."""
    try:
        cap = int(pltpu.get_tpu_info().vmem_capacity_bytes)
    except Exception:
        return 32 * 1024 * 1024
    return max(32 * 1024 * 1024, min((3 * cap) // 4, 96 * 1024 * 1024))


def cross_attention_forward(feats1, feats2, params, nhead, *, block_b=None,
                            add_residual=False, out_dtype=None):
    """Cross_Attention.forward.  feats1: (B, C, N), feats2: (B, C, M) -> (B, C, N).

    add_residual=True fuses the `x + block(x, y)` residual into the kernel store.
    """
    B, C, N = feats1.shape
    _, _, M = feats2.shape
    assert C % nhead == 0
    dims = C // nhead
    if block_b is None:
        block_b = _pick_block_b(B)
    assert B % block_b == 0
    if out_dtype is None:
        out_dtype = feats1.dtype

    bf16, f32 = jnp.bfloat16, jnp.float32

    # Permutation mapping PyTorch's interleaved channel c = d*nhead + h to the
    # head-contiguous index h*dims + d; folded into the weights here.
    perm = np.arange(C).reshape(dims, nhead).T.reshape(-1)
    scale = 1.0 / (dims ** 0.5)     # scores = q^T k * scale; folded into the q conv

    # Fold self.conv (w_o, b_o) into mlp[0]'s right half (f32 algebra, tiny).
    wm1 = params["wm1"].astype(f32)
    wm1_l, wm1_r = wm1[:, :C], wm1[:, C:]
    wm1_r_folded = wm1_r @ params["wc"].astype(f32)[:, perm]          # (2C, C)
    bm1_folded = params["bm1"].astype(f32) + wm1_r @ params["bc"].astype(f32)

    w_c_slab = jnp.concatenate(
        [params["wq"][perm] * scale,          # q conv rows (pre-scaled)
         params["wk"][perm],                  # k conv rows
         params["wv"][perm]],                 # v conv rows
        axis=0).astype(bf16)                  # (3C, C)
    w_2c_slab = jnp.concatenate(
        [jnp.concatenate([wm1_l, wm1_r_folded], axis=1),   # mlp[0] + self.conv
         params["wm2"]], axis=0).astype(bf16)              # (3C, 2C)
    b_slab = jnp.concatenate(
        [params["bq"][perm] * scale, params["bk"][perm], params["bv"][perm],
         bm1_folded, params["bm2"]]
    ).reshape(-1, 1).astype(f32)                           # (6C, 1)

    kernel = functools.partial(_cross_attention_kernel, nhead=nhead, dims=dims,
                               block_b=block_b, add_residual=add_residual)
    return pl.pallas_call(
        kernel,
        out_shape=jax.ShapeDtypeStruct((B, C, N), out_dtype),
        grid=(B // block_b,),
        in_specs=[
            pl.BlockSpec((block_b, C, N), lambda b: (b, 0, 0)),   # feats1 (bf16)
            pl.BlockSpec((block_b, C, M), lambda b: (b, 0, 0)),   # feats2 (bf16)
            pl.BlockSpec((3 * C, C), lambda b: (0, 0)),           # weight slab (C cols)
            pl.BlockSpec((3 * C, 2 * C), lambda b: (0, 0)),       # weight slab (2C cols)
            pl.BlockSpec((6 * C, 1), lambda b: (0, 0)),           # bias slab (f32)
        ],
        out_specs=pl.BlockSpec((block_b, C, N), lambda b: (b, 0, 0)),
        compiler_params=pltpu.CompilerParams(
            dimension_semantics=("parallel",),
            vmem_limit_bytes=_vmem_limit_bytes(),
        ),
    )(feats1.astype(bf16), feats2.astype(bf16), w_c_slab, w_2c_slab, b_slab)


def information_interactive_forward(coords1, feats1, coords2, feats2,
                                    layer_names, blocks_params, nhead):
    """InformationInteractive.forward for 'cross_attn' layers (Pallas kernel inside).

    coords are accepted for signature fidelity; they are only consumed by 'gcn' blocks.
    The residual stream is kept in bf16 across layers and the residual add is
    fused into the kernel (bf16 output) -- no per-layer XLA elementwise passes.
    """
    # TODO(synk): 'gcn' blocks (kNN top-k + gather_points + Conv2d/InstanceNorm2d) are
    # data-dependent gathers; not implemented as a Pallas kernel here.
    in_dtype = feats1.dtype
    feats1 = feats1.astype(jnp.bfloat16)
    feats2 = feats2.astype(jnp.bfloat16)
    for layer_name, p in zip(layer_names, blocks_params):
        if layer_name == "cross_attn":
            # Matches PyTorch ordering: feats2's update uses the already-updated feats1.
            feats1 = cross_attention_forward(feats1, feats2, p, nhead, add_residual=True)
            feats2 = cross_attention_forward(feats2, feats1, p, nhead, add_residual=True)
        else:
            raise NotImplementedError(f"layer {layer_name!r} not supported in this script")
    return feats1.astype(in_dtype), feats2.astype(in_dtype)


def init_params(key, C):
    names_shapes = [("wq", (C, C)), ("bq", (C,)),
                    ("wk", (C, C)), ("bk", (C,)),
                    ("wv", (C, C)), ("bv", (C,)),
                    ("wc", (C, C)), ("bc", (C,)),
                    ("wm1", (2 * C, 2 * C)), ("bm1", (2 * C,)),
                    ("wm2", (C, 2 * C)), ("bm2", (C,))]
    keys = jax.random.split(key, len(names_shapes))
    return {name: 0.1 * jax.random.normal(k, shape, jnp.float32)
            for k, (name, shape) in zip(keys, names_shapes)}


def reference(feats1, feats2, params, nhead):
    """Pure-JAX (f32, HIGHEST) replica of the PyTorch Cross_Attention forward."""
    hi = jax.lax.Precision.HIGHEST

    def conv1x1(x, w, b):
        return jnp.einsum("oc,bcn->bon", w, x, precision=hi) + b[None, :, None]

    B, C, _ = feats1.shape
    dims = C // nhead
    q = conv1x1(feats1, params["wq"], params["bq"]).reshape(B, dims, nhead, -1)
    k = conv1x1(feats2, params["wk"], params["bk"]).reshape(B, dims, nhead, -1)
    v = conv1x1(feats2, params["wv"], params["bv"]).reshape(B, dims, nhead, -1)
    scores = jnp.einsum("bdhn,bdhm->bhnm", q, k, precision=hi) / dims ** 0.5
    attn = jax.nn.softmax(scores, axis=-1)
    f = jnp.einsum("bhnm,bdhm->bdhn", attn, v, precision=hi).reshape(B, C, -1)
    f = conv1x1(f, params["wc"], params["bc"])
    cat = jnp.concatenate([feats1, f], axis=1)
    h = conv1x1(cat, params["wm1"], params["bm1"])
    mean = h.mean(axis=2, keepdims=True)
    var = ((h - mean) ** 2).mean(axis=2, keepdims=True)
    h = jax.nn.relu((h - mean) / jnp.sqrt(var + 1e-5))
    return conv1x1(h, params["wm2"], params["bm2"])


if __name__ == "__main__":
    B, feat_dims, nhead, N, M = 2, 32, 4, 128, 64
    key = jax.random.PRNGKey(0)
    k1, k2, kp, k3, k4 = jax.random.split(key, 5)
    feats1 = jax.random.normal(k1, (B, feat_dims, N), jnp.float32)
    feats2 = jax.random.normal(k2, (B, feat_dims, M), jnp.float32)
    params = init_params(kp, feat_dims)

    # 1) Fused Cross_Attention kernel vs f32 reference (no residual, f32 out;
    #    kernel runs bf16 MXU matmuls with f32 accumulation).
    out = cross_attention_forward(feats1, feats2, params, nhead)
    out = jax.block_until_ready(out)
    ref = reference(feats1, feats2, params, nhead)
    assert out.shape == (B, feat_dims, N) and out.dtype == jnp.float32
    max_err = float(jnp.max(jnp.abs(out - ref)))
    assert bool(jnp.allclose(out, ref, rtol=3e-2, atol=3e-2)), max_err

    # 2) Residual-fused path with block_b > 1 (exercises the in-kernel fori_loop).
    B2 = 4
    feats1b = jax.random.normal(k3, (B2, feat_dims, N), jnp.float32)
    feats2b = jax.random.normal(k4, (B2, feat_dims, M), jnp.float32)
    out_res = cross_attention_forward(feats1b, feats2b, params, nhead,
                                      block_b=2, add_residual=True)
    out_res = jax.block_until_ready(out_res)
    ref_res = feats1b + reference(feats1b, feats2b, params, nhead)
    max_err2 = float(jnp.max(jnp.abs(out_res - ref_res)))
    assert bool(jnp.allclose(out_res, ref_res, rtol=5e-2, atol=5e-2)), max_err2

    # 3) InformationInteractive composition ('cross_attn' layers only), bf16
    #    residual stream with the residual add fused into the kernel output.
    coords1 = jax.random.normal(jax.random.PRNGKey(1), (B, 3, N), jnp.float32)
    coords2 = jax.random.normal(jax.random.PRNGKey(2), (B, 3, M), jnp.float32)
    f1o, f2o = information_interactive_forward(coords1, feats1, coords2, feats2,
                                               ("cross_attn",), (params,), nhead)
    f1o, f2o = jax.block_until_ready((f1o, f2o))
    assert f1o.shape == (B, feat_dims, N) and f2o.shape == (B, feat_dims, M)

    print("KERNEL_OK")
</pallas_src>

<mosaic_0001>
module attributes {stable_mosaic.version = 11 : i64} {
  func.func @_cross_attention_kernel(%arg0: i32, %arg1: memref<1x32x128xbf16, #tpu.memory_space<vmem>>, %arg2: memref<1x32x64xbf16, #tpu.memory_space<vmem>>, %arg3: memref<96x32xbf16, #tpu.memory_space<vmem>>, %arg4: memref<96x64xbf16, #tpu.memory_space<vmem>>, %arg5: memref<192x1xf32, #tpu.memory_space<vmem>>, %arg6: memref<1x32x128xf32, #tpu.memory_space<vmem>>) attributes {dimension_semantics = [#tpu.dimension_semantics<parallel>], iteration_bounds = array<i64: 2>, scalar_prefetch = 0 : i64, scratch_operands = 0 : i64, tpu.core_type = #tpu.core_type<tc>, window_params = [{transform_indices = @transform_0, window_bounds = array<i64: 1, 32, 128>}, {transform_indices = @transform_1, window_bounds = array<i64: 1, 32, 64>}, {pipeline_mode = #tpu.pipeline_mode<synchronous>, transform_indices = @transform_2, window_bounds = array<i64: 96, 32>}, {pipeline_mode = #tpu.pipeline_mode<synchronous>, transform_indices = @transform_3, window_bounds = array<i64: 96, 64>}, {pipeline_mode = #tpu.pipeline_mode<synchronous>, transform_indices = @transform_4, window_bounds = array<i64: 192, 1>}, {transform_indices = @transform_5, window_bounds = array<i64: 1, 32, 128>}]} {
    %c0 = arith.constant 0 : index
    %c0_0 = arith.constant 0 : index
    %0 = vector.load %arg3[%c0, %c0_0] : memref<96x32xbf16, #tpu.memory_space<vmem>>, vector<32x32xbf16>
    %c32 = arith.constant 32 : index
    %c0_1 = arith.constant 0 : index
    %1 = vector.load %arg3[%c32, %c0_1] : memref<96x32xbf16, #tpu.memory_space<vmem>>, vector<64x32xbf16>
    %c0_2 = arith.constant 0 : index
    %c0_3 = arith.constant 0 : index
    %2 = vector.load %arg4[%c0_2, %c0_3] : memref<96x64xbf16, #tpu.memory_space<vmem>>, vector<64x64xbf16>
    %c64 = arith.constant 64 : index
    %c0_4 = arith.constant 0 : index
    %3 = vector.load %arg4[%c64, %c0_4] : memref<96x64xbf16, #tpu.memory_space<vmem>>, vector<32x64xbf16>
    %c0_5 = arith.constant 0 : index
    %c0_6 = arith.constant 0 : index
    %4 = vector.load %arg5[%c0_5, %c0_6] : memref<192x1xf32, #tpu.memory_space<vmem>>, vector<32x1xf32>
    %c32_7 = arith.constant 32 : index
    %c0_8 = arith.constant 0 : index
    %5 = vector.load %arg5[%c32_7, %c0_8] : memref<192x1xf32, #tpu.memory_space<vmem>>, vector<64x1xf32>
    %c96 = arith.constant 96 : index
    %c0_9 = arith.constant 0 : index
    %6 = vector.load %arg5[%c96, %c0_9] : memref<192x1xf32, #tpu.memory_space<vmem>>, vector<64x1xf32>
    %c160 = arith.constant 160 : index
    %c0_10 = arith.constant 0 : index
    %7 = vector.load %arg5[%c160, %c0_10] : memref<192x1xf32, #tpu.memory_space<vmem>>, vector<32x1xf32>
    %c0_11 = arith.constant 0 : index
    %c0_12 = arith.constant 0 : index
    %c0_13 = arith.constant 0 : index
    %8 = vector.load %arg1[%c0_11, %c0_12, %c0_13] : memref<1x32x128xbf16, #tpu.memory_space<vmem>>, vector<1x32x128xbf16>
    %9 = vector.shape_cast %8 : vector<1x32x128xbf16> to vector<32x128xbf16>
    %c0_14 = arith.constant 0 : index
    %c0_15 = arith.constant 0 : index
    %c0_16 = arith.constant 0 : index
    %10 = vector.load %arg2[%c0_14, %c0_15, %c0_16] : memref<1x32x64xbf16, #tpu.memory_space<vmem>>, vector<1x32x64xbf16>
    %11 = vector.shape_cast %10 : vector<1x32x64xbf16> to vector<32x64xbf16>
    %cst = arith.constant dense<0.000000e+00> : vector<32x128xf32>
    %12 = tpu.matmul %0, %9, %cst {dimension_numbers = #tpu.dot_dimension_numbers<[1], [0], [0], [1], [0, 0, 1, 1], [], []>} : vector<32x32xbf16>, vector<32x128xbf16>, vector<32x128xf32> -> vector<32x128xf32>
    %13 = vector.broadcast %4 : vector<32x1xf32> to vector<32x128xf32>
    %14 = arith.addf %12, %13 : vector<32x128xf32>
    %cst_17 = arith.constant dense<0.000000e+00> : vector<64x64xf32>
    %15 = tpu.matmul %1, %11, %cst_17 {dimension_numbers = #tpu.dot_dimension_numbers<[1], [0], [0], [1], [0, 0, 1, 1], [], []>} : vector<64x32xbf16>, vector<32x64xbf16>, vector<64x64xf32> -> vector<64x64xf32>
    %16 = vector.broadcast %5 : vector<64x1xf32> to vector<64x64xf32>
    %17 = arith.addf %15, %16 : vector<64x64xf32>
    %18 = vector.shape_cast %14 : vector<32x128xf32> to vector<4x8x128xf32>
    %19 = arith.truncf %18 : vector<4x8x128xf32> to vector<4x8x128xbf16>
    %20 = vector.extract_strided_slice %17 {offsets = [0, 0], sizes = [32, 64], strides = [1, 1]} : vector<64x64xf32> to vector<32x64xf32>
    %21 = vector.shape_cast %20 : vector<32x64xf32> to vector<4x8x64xf32>
    %22 = arith.truncf %21 : vector<4x8x64xf32> to vector<4x8x64xbf16>
    %23 = vector.extract_strided_slice %17 {offsets = [32, 0], sizes = [32, 64], strides = [1, 1]} : vector<64x64xf32> to vector<32x64xf32>
    %24 = vector.shape_cast %23 : vector<32x64xf32> to vector<4x8x64xf32>
    %25 = arith.truncf %24 : vector<4x8x64xf32> to vector<4x8x64xbf16>
    %cst_18 = arith.constant dense<0.000000e+00> : vector<4x128x64xf32>
    %26 = tpu.matmul %19, %22, %cst_18 {dimension_numbers = #tpu.dot_dimension_numbers<[1], [1], [2], [2], [0, 0, 0, 2, 1, 2], [0], [0]>} : vector<4x8x128xbf16>, vector<4x8x64xbf16>, vector<4x128x64xf32> -> vector<4x128x64xf32>
    %cst_19 = arith.constant dense<0xFF800000> : vector<4x128xf32>
    %27 = vector.multi_reduction <maximumf>, %26, %cst_19 [2] : vector<4x128x64xf32> to vector<4x128xf32>
    %28 = vector.shape_cast %27 : vector<4x128xf32> to vector<4x128x1xf32>
    %29 = vector.broadcast %28 : vector<4x128x1xf32> to vector<4x128x64xf32>
    %30 = arith.subf %26, %29 : vector<4x128x64xf32>
    %31 = math.exp %30 : vector<4x128x64xf32>
    %cst_20 = arith.constant dense<0.000000e+00> : vector<4x128xf32>
    %32 = vector.multi_reduction <add>, %31, %cst_20 [2] : vector<4x128x64xf32> to vector<4x128xf32>
    %33 = arith.truncf %31 : vector<4x128x64xf32> to vector<4x128x64xbf16>
    %cst_21 = arith.constant dense<0.000000e+00> : vector<4x8x128xf32>
    %34 = tpu.matmul %25, %33, %cst_21 {dimension_numbers = #tpu.dot_dimension_numbers<[2], [2], [1], [1], [0, 0, 0, 1, 1, 1], [0], [0]>} : vector<4x8x64xbf16>, vector<4x128x64xbf16>, vector<4x8x128xf32> -> vector<4x8x128xf32>
    %35 = tpu.reciprocal %32 {approx = true} : vector<4x128xf32> -> vector<4x128xf32>
    %36 = vector.shape_cast %35 : vector<4x128xf32> to vector<4x1x128xf32>
    %37 = vector.broadcast %36 : vector<4x1x128xf32> to vector<4x8x128xf32>
    %38 = arith.mulf %34, %37 : vector<4x8x128xf32>
    %39 = vector.shape_cast %38 : vector<4x8x128xf32> to vector<32x128xf32>
    %40 = arith.truncf %39 : vector<32x128xf32> to vector<32x128xbf16>
    %41 = tpu.concatenate %9, %40 in 0 : vector<32x128xbf16>, vector<32x128xbf16> -> vector<64x128xbf16>
    %cst_22 = arith.constant dense<0.000000e+00> : vector<64x128xf32>
    %42 = tpu.matmul %2, %41, %cst_22 {dimension_numbers = #tpu.dot_dimension_numbers<[1], [0], [0], [1], [0, 0, 1, 1], [], []>} : vector<64x64xbf16>, vector<64x128xbf16>, vector<64x128xf32> -> vector<64x128xf32>
    %43 = vector.broadcast %6 : vector<64x1xf32> to vector<64x128xf32>
    %44 = arith.addf %42, %43 : vector<64x128xf32>
    %cst_23 = arith.constant dense<0.000000e+00> : vector<64xf32>
    %45 = vector.multi_reduction <add>, %44, %cst_23 [1] : vector<64x128xf32> to vector<64xf32>
    %46 = vector.shape_cast %45 : vector<64xf32> to vector<64x1xf32>
    %cst_24 = arith.constant 7.812500e-03 : f32
    %47 = vector.broadcast %cst_24 : f32 to vector<64x1xf32>
    %48 = arith.mulf %46, %47 : vector<64x1xf32>
    %49 = arith.mulf %44, %44 : vector<64x128xf32>
    %cst_25 = arith.constant dense<0.000000e+00> : vector<64xf32>
    %50 = vector.multi_reduction <add>, %49, %cst_25 [1] : vector<64x128xf32> to vector<64xf32>
    %51 = vector.shape_cast %50 : vector<64xf32> to vector<64x1xf32>
    %cst_26 = arith.constant 7.812500e-03 : f32
    %52 = vector.broadcast %cst_26 : f32 to vector<64x1xf32>
    %53 = arith.mulf %51, %52 : vector<64x1xf32>
    %54 = arith.mulf %48, %48 : vector<64x1xf32>
    %55 = arith.subf %53, %54 : vector<64x1xf32>
    %cst_27 = arith.constant 0.000000e+00 : f32
    %56 = vector.broadcast %cst_27 : f32 to vector<64x1xf32>
    %57 = arith.maximumf %55, %56 : vector<64x1xf32>
    %58 = vector.broadcast %48 : vector<64x1xf32> to vector<64x128xf32>
    %59 = arith.subf %44, %58 : vector<64x128xf32>
    %cst_28 = arith.constant 9.99999974E-6 : f32
    %60 = vector.broadcast %cst_28 : f32 to vector<64x1xf32>
    %61 = arith.addf %57, %60 : vector<64x1xf32>
    %62 = math.rsqrt %61 : vector<64x1xf32>
    %63 = vector.broadcast %62 : vector<64x1xf32> to vector<64x128xf32>
    %64 = arith.mulf %59, %63 : vector<64x128xf32>
    %cst_29 = arith.constant 0.000000e+00 : f32
    %65 = vector.broadcast %cst_29 : f32 to vector<64x128xf32>
    %66 = arith.maximumf %64, %65 : vector<64x128xf32>
    %67 = arith.truncf %66 : vector<64x128xf32> to vector<64x128xbf16>
    %cst_30 = arith.constant dense<0.000000e+00> : vector<32x128xf32>
    %68 = tpu.matmul %3, %67, %cst_30 {dimension_numbers = #tpu.dot_dimension_numbers<[1], [0], [0], [1], [0, 0, 1, 1], [], []>} : vector<32x64xbf16>, vector<64x128xbf16>, vector<32x128xf32> -> vector<32x128xf32>
    %69 = vector.broadcast %7 : vector<32x1xf32> to vector<32x128xf32>
    %70 = arith.addf %68, %69 : vector<32x128xf32>
    %c0_31 = arith.constant 0 : index
    %c0_32 = arith.constant 0 : index
    %c0_33 = arith.constant 0 : index
    %71 = vector.load %arg6[%c0_31, %c0_32, %c0_33] : memref<1x32x128xf32, #tpu.memory_space<vmem>>, vector<1x32x128xf32>
    %72 = vector.shape_cast %71 : vector<1x32x128xf32> to vector<32x128xf32>
    %73 = vector.shape_cast %70 : vector<32x128xf32> to vector<1x32x128xf32>
    tpu.vector_store %arg6[%c0_31, %c0_32, %c0_33], %73 {strides = array<i32>} : memref<1x32x128xf32, #tpu.memory_space<vmem>>, vector<1x32x128xf32>,
    return
  }
  func.func @transform_0(%arg0: i32) -> (i32, i32, i32) {
    %c0_i32 = arith.constant 0 : i32
    %c0_i32_0 = arith.constant 0 : i32
    %c0_i32_1 = arith.constant 0 : i32
    return %arg0, %c0_i32, %c0_i32_0 : i32, i32, i32
  }
  func.func @transform_1(%arg0: i32) -> (i32, i32, i32) {
    %c0_i32 = arith.constant 0 : i32
    %c0_i32_0 = arith.constant 0 : i32
    %c0_i32_1 = arith.constant 0 : i32
    return %arg0, %c0_i32, %c0_i32_0 : i32, i32, i32
  }
  func.func @transform_2(%arg0: i32) -> (i32, i32) {
    %c0_i32 = arith.constant 0 : i32
    %c0_i32_0 = arith.constant 0 : i32
    %c0_i32_1 = arith.constant 0 : i32
    return %c0_i32, %c0_i32_0 : i32, i32
  }
  func.func @transform_3(%arg0: i32) -> (i32, i32) {
    %c0_i32 = arith.constant 0 : i32
    %c0_i32_0 = arith.constant 0 : i32
    %c0_i32_1 = arith.constant 0 : i32
    return %c0_i32, %c0_i32_0 : i32, i32
  }
  func.func @transform_4(%arg0: i32) -> (i32, i32) {
    %c0_i32 = arith.constant 0 : i32
    %c0_i32_0 = arith.constant 0 : i32
    %c0_i32_1 = arith.constant 0 : i32
    return %c0_i32, %c0_i32_0 : i32, i32
  }
  func.func @transform_5(%arg0: i32) -> (i32, i32, i32) {
    %c0_i32 = arith.constant 0 : i32
    %c0_i32_0 = arith.constant 0 : i32
    %c0_i32_1 = arith.constant 0 : i32
    return %arg0, %c0_i32, %c0_i32_0 : i32, i32, i32
  }
}

</mosaic_0001>

<llo_original>
// kernel: tpu_custom_call.1
$region0: #{tpu_custom_call.1}
  #allocation0 [shape = 'u32[]', space=smem, size = 0x4, offset = 0x4, fixed_abs, tag = 'smem constant byte address 0x4 - core index']
  #allocation1 [shape = 'u32[144,128]{1,0:T(1,128)}', space=vmem, size = 0x12000, scoped, tag = 'internal scratch']
  %s0 = inlined_call_operand.vmem [shape: bf16[2,32,128], index: 0, kind: input, shape index: {}]
  %s1 = inlined_call_operand.vmem [shape: bf16[2,32,64], index: 1, kind: input, shape index: {}]
  %s2 = inlined_call_operand.vmem [shape: bf16[96,32], index: 2, kind: input, shape index: {}]
  %s3 = inlined_call_operand.vmem [shape: bf16[96,64], index: 3, kind: input, shape index: {}]
  %s4 = inlined_call_operand.vmem [shape: f32[192,1], index: 4, kind: input, shape index: {}]
  %s5 = inlined_call_operand.hbm [shape: f32[2,32,128], index: 5, kind: output, shape index: {}]
  %s6 = sld [smem:[#allocation0]]
  $region53: #{tpu_custom_call.1} parent=0
    _
  %s8 = ssub.s32 1, %s6
  %s9 = scalar_select 0, %s8, %s6
  $region1: #{tpu_custom_call.1} parent=0
    #allocation2 [shape = 'u8[32768]{0}', space=vmem, size = 0x8000, scoped, tag = 'output window, operand 0']
    #allocation3 [shape = 's32[2]{0}', space=sflag, size = 0x8, scoped, tag = 'scoped memory for tpu_custom_call.1']
    %10 = vsyncpa [#allocation3], 0
    %s11 = scalar_lea.sflag [#allocation3], 1
    %12 = vsyncpa %s11, 0
    loop: start=0, step=1, limit=4
    $region2: #{tpu_custom_call.1} parent=1 // loop_pre_header
      _
    $region3: #{tpu_custom_call.1} parent=1 // loop_header
      %s14 = sphi 0, %s18
      %p15 = scmp.ge.s32.totalorder %s14, 4
      %s24 = sphi 0, %s26
      %s27 = sphi 0, %s24
      %s28 = sphi 0, %s27
      %s44 = sphi 0, %s28
      %s50 = sphi 0, %s52
      %s53 = sphi 0, %s50
      %s54 = sphi 0, %s53
      %s70 = sphi 0, %s54
      %s74 = sphi 0, %s74
      %s76 = sphi 0, %s74
      %s77 = sphi 0, %s76
      %s91 = sphi 0, %s77
      %s95 = sphi 0, %s95
      %s97 = sphi 0, %s95
      %s98 = sphi 0, %s97
      %s112 = sphi 0, %s98
      %s116 = sphi 0, %s116
      %s118 = sphi 0, %s116
      %s119 = sphi 0, %s118
      %s133 = sphi 0, %s119
      %s139 = sphi 0, %s141
      %s142 = sphi 0, %s139
      %s143 = sphi 0, %s142
      %s159 = sphi 0, %s143
    $region4: #{tpu_custom_call.1} parent=1 // loop_header_branch
      %17 = sbr.rel (%p15) target = $region8
    $region5: #{tpu_custom_call.1} parent=1 // loop_body
      %s19 = ssub.s32 %s14, 1
      %s20 = ssub.s32 %s14, 2
      %s21 = sadd.s32 %s14, 1
      %s22 = ssub.s32 %s14, %s21
      %p23 = scmp.eq.s32.totalorder %s22, 0
      %s25 = sadd.s32 %s24, 1
      %s26 = scalar_select %p23, %s24, %s25
      %p29 = pneg %p23
      %p30 = scmp.eq.s32.totalorder %s14, 1
      %p31 = por %p29, %p30
      %p32 = scmp.ne.s32.totalorder %s24, %s27
      %p33 = scmp.eq.s32.totalorder %s14, 0
      %p34 = por %p32, %p33
      %p35 = scmp.ne.s32.totalorder %s24, %s27
      %p36 = scmp.eq.s32.totalorder %s19, 1
      %p37 = por %p35, %p36
      %p38 = scmp.ne.s32.totalorder %s27, %s28
      %p39 = scmp.eq.s32.totalorder %s19, 0
      %p40 = por %p38, %p39
      %p41 = scmp.ne.s32.totalorder %s27, %s28
      %p42 = scmp.eq.s32.totalorder %s20, 1
      %p43 = por %p41, %p42
      %p45 = scmp.ne.s32.totalorder %s28, %s44
      %p46 = scmp.eq.s32.totalorder %s20, 0
      %p47 = por %p45, %p46
      %s48 = ssub.s32 %s14, %s21
      %p49 = scmp.eq.s32.totalorder %s48, 0
      %s51 = sadd.s32 %s50, 1
      %s52 = scalar_select %p49, %s50, %s51
      %p55 = pneg %p49
      %p56 = scmp.eq.s32.totalorder %s14, 1
      %p57 = por %p55, %p56
      %p58 = scmp.ne.s32.totalorder %s50, %s53
      %p59 = scmp.eq.s32.totalorder %s14, 0
      %p60 = por %p58, %p59
      %p61 = scmp.ne.s32.totalorder %s50, %s53
      %p62 = scmp.eq.s32.totalorder %s19, 1
      %p63 = por %p61, %p62
      %p64 = scmp.ne.s32.totalorder %s53, %s54
      %p65 = scmp.eq.s32.totalorder %s19, 0
      %p66 = por %p64, %p65
      %p67 = scmp.ne.s32.totalorder %s53, %s54
      %p68 = scmp.eq.s32.totalorder %s20, 1
      %p69 = por %p67, %p68
      %p71 = scmp.ne.s32.totalorder %s54, %s70
      %p72 = scmp.eq.s32.totalorder %s20, 0
      %p73 = por %p71, %p72
      %s75 = sadd.s32 %s74, 1
      %p78 = scmp.eq.s32.totalorder %s14, 1
      %p79 = scmp.ne.s32.totalorder %s74, %s76
      %p80 = scmp.eq.s32.totalorder %s14, 0
      %p81 = por %p79, %p80
      %p82 = scmp.ne.s32.totalorder %s74, %s76
      %p83 = scmp.eq.s32.totalorder %s19, 1
      %p84 = por %p82, %p83
      %p85 = scmp.ne.s32.totalorder %s76, %s77
      %p86 = scmp.eq.s32.totalorder %s19, 0
      %p87 = por %p85, %p86
      %p88 = scmp.ne.s32.totalorder %s76, %s77
      %p89 = scmp.eq.s32.totalorder %s20, 1
      %p90 = por %p88, %p89
      %p92 = scmp.ne.s32.totalorder %s77, %s91
      %p93 = scmp.eq.s32.totalorder %s20, 0
      %p94 = por %p92, %p93
      %s96 = sadd.s32 %s95, 1
      %p99 = scmp.eq.s32.totalorder %s14, 1
      %p100 = scmp.ne.s32.totalorder %s95, %s97
      %p101 = scmp.eq.s32.totalorder %s14, 0
      %p102 = por %p100, %p101
      %p103 = scmp.ne.s32.totalorder %s95, %s97
      %p104 = scmp.eq.s32.totalorder %s19, 1
      %p105 = por %p103, %p104
      %p106 = scmp.ne.s32.totalorder %s97, %s98
      %p107 = scmp.eq.s32.totalorder %s19, 0
      %p108 = por %p106, %p107
      %p109 = scmp.ne.s32.totalorder %s97, %s98
      %p110 = scmp.eq.s32.totalorder %s20, 1
      %p111 = por %p109, %p110
      %p113 = scmp.ne.s32.totalorder %s98, %s112
      %p114 = scmp.eq.s32.totalorder %s20, 0
      %p115 = por %p113, %p114
      %s117 = sadd.s32 %s116, 1
      %p120 = scmp.eq.s32.totalorder %s14, 1
      %p121 = scmp.ne.s32.totalorder %s116, %s118
      %p122 = scmp.eq.s32.totalorder %s14, 0
      %p123 = por %p121, %p122
      %p124 = scmp.ne.s32.totalorder %s116, %s118
      %p125 = scmp.eq.s32.totalorder %s19, 1
      %p126 = por %p124, %p125
      %p127 = scmp.ne.s32.totalorder %s118, %s119
      %p128 = scmp.eq.s32.totalorder %s19, 0
      %p129 = por %p127, %p128
      %p130 = scmp.ne.s32.totalorder %s118, %s119
      %p131 = scmp.eq.s32.totalorder %s20, 1
      %p132 = por %p130, %p131
      %p134 = scmp.ne.s32.totalorder %s119, %s133
      %p135 = scmp.eq.s32.totalorder %s20, 0
      %p136 = por %p134, %p135
      %s137 = ssub.s32 %s14, %s21
      %p138 = scmp.eq.s32.totalorder %s137, 0
      %s140 = sadd.s32 %s139, 1
      %s141 = scalar_select %p138, %s139, %s140
      %p144 = pneg %p138
      %p145 = scmp.eq.s32.totalorder %s14, 1
      %p146 = por %p144, %p145
      %p147 = scmp.ne.s32.totalorder %s139, %s142
      %p148 = scmp.eq.s32.totalorder %s14, 0
      %p149 = por %p147, %p148
      %p150 = scmp.ne.s32.totalorder %s139, %s142
      %p151 = scmp.eq.s32.totalorder %s19, 1
      %p152 = por %p150, %p151
      %p153 = scmp.ne.s32.totalorder %s142, %s143
      %p154 = scmp.eq.s32.totalorder %s19, 0
      %p155 = por %p153, %p154
      %p156 = scmp.ne.s32.totalorder %s142, %s143
      %p157 = scmp.eq.s32.totalorder %s20, 1
      %p158 = por %p156, %p157
      %p160 = scmp.ne.s32.totalorder %s143, %s159
      %p161 = scmp.eq.s32.totalorder %s20, 0
      %p162 = por %p160, %p161
      %p163 = scmp.le.s32.totalorder 1, %s14
      %p164 = scmp.lt.s32.totalorder %s14, 3
      %p165 = pnand %p163, %p164
      %p166 = pneg %p165
      // Predicated region
      $region9: #{tpu_custom_call.1} parent=5 // pred_check
        _
      $region10: #{tpu_custom_call.1} parent=5 // pred_check_branch
        %168 = sbr.rel (%p165) target = $region12
      $region11: #{tpu_custom_call.1} parent=5 // pred_region
        %s169 = ssub.s32 %s14, 1
        // Predicated region
        $region13: #{tpu_custom_call.1} parent=11 // pred_check
          %p170 = pneg %p87
        $region14: #{tpu_custom_call.1} parent=11 // pred_check_branch
          %172 = sbr.rel (%p170) target = $region16
        $region15: #{tpu_custom_call.1} parent=11 // pred_region
          _
        $region16: #{tpu_custom_call.1} parent=11 // pred_fallthru
          _
        // Predicated region
        $region17: #{tpu_custom_call.1} parent=11 // pred_check
          %p173 = pneg %p108
        $region18: #{tpu_custom_call.1} parent=11 // pred_check_branch
          %175 = sbr.rel (%p173) target = $region20
        $region19: #{tpu_custom_call.1} parent=11 // pred_region
          _
        $region20: #{tpu_custom_call.1} parent=11 // pred_fallthru
          _
        // Predicated region
        $region21: #{tpu_custom_call.1} parent=11 // pred_check
          %p176 = pneg %p129
        $region22: #{tpu_custom_call.1} parent=11 // pred_check_branch
          %178 = sbr.rel (%p176) target = $region24
        $region23: #{tpu_custom_call.1} parent=11 // pred_region
          _
        $region24: #{tpu_custom_call.1} parent=11 // pred_fallthru
          _
      $region12: #{tpu_custom_call.1} parent=5 // pred_fallthru
        _
      %p179 = scmp.lt.s32.totalorder %s14, 2
      // Predicated region
      $region25: #{tpu_custom_call.1} parent=5 // pred_check
        %p180 = pneg %p179
      $region26: #{tpu_custom_call.1} parent=5 // pred_check_branch
        %182 = sbr.rel (%p180) target = $region28
      $region27: #{tpu_custom_call.1} parent=5 // pred_region
        // Predicated region
        $region29: #{tpu_custom_call.1} parent=27 // pred_check
          %p183 = pneg %p34
        $region30: #{tpu_custom_call.1} parent=27 // pred_check_branch
          %185 = sbr.rel (%p183) target = $region32
        $region31: #{tpu_custom_call.1} parent=27 // pred_region
          %p186 = scmp.lt.s32.totalorder %s14, 1
          %s187 = scalar_select %p186, %s14, 1
          %s188 = smul.addr %s187, 4
          %s189 = smul.addr %s188, 4
          %s190 = scalar_lea.vmem %s0, %s189
        $region32: #{tpu_custom_call.1} parent=27 // pred_fallthru
          _
        // Predicated region
        $region33: #{tpu_custom_call.1} parent=27 // pred_check
          %p191 = pneg %p60
        $region34: #{tpu_custom_call.1} parent=27 // pred_check_branch
          %193 = sbr.rel (%p191) target = $region36
        $region35: #{tpu_custom_call.1} parent=27 // pred_region
          %p194 = scmp.lt.s32.totalorder %s14, 1
          %s195 = scalar_select %p194, %s14, 1
          %s196 = smul.addr %s195, 4
          %s197 = smul.addr %s196, 4
          %s198 = scalar_lea.vmem %s1, %s197
        $region36: #{tpu_custom_call.1} parent=27 // pred_fallthru
          _
      $region28: #{tpu_custom_call.1} parent=5 // pred_fallthru
        _
      %p199 = scmp.le.s32.totalorder 1, %s14
      %p200 = scmp.lt.s32.totalorder %s14, 3
      %p201 = pnand %p199, %p200
      %p202 = pneg %p201
      // Predicated region
      $region37: #{tpu_custom_call.1} parent=5 // pred_check
        _
      $region38: #{tpu_custom_call.1} parent=5 // pred_check_branch
        %204 = sbr.rel (%p201) target = $region40
      $region39: #{tpu_custom_call.1} parent=5 // pred_region
        %s205 = ssub.s32 %s14, 1
        %p206 = scmp.lt.s32.totalorder %s19, 1
        %s207 = scalar_select %p206, %s19, 1
        %s208 = smul.addr %s207, 4
        %s209 = smul.addr %s208, 4
        %s210 = scalar_lea.vmem %s0, %s209
        %p211 = pneg %p40
        %p212 = pneg %p37
        %p213 = scmp.lt.s32.totalorder %s19, 1
        %s214 = scalar_select %p213, %s19, 1
        %s215 = smul.addr %s214, 4
        %s216 = smul.addr %s215, 4
        %s217 = scalar_lea.vmem %s1, %s216
        %p218 = pneg %p66
        %p219 = pneg %p63
        %p220 = pneg %p87
        %p221 = pneg %p84
        %p222 = pneg %p108
        %p223 = pneg %p105
        %p224 = pneg %p129
        %p225 = pneg %p126
        %p226 = pneg %p155
        %p227 = pneg %p152
        %s228 = sand.u32 %s142, 1
        %s229 = scalar_lea.sflag [#allocation3], %s228
        %s230 = sand.u32 %s142, 1
        %s231 = smul.addr %s230, 32
        %s232 = scalar_lea.vmem [#allocation2], %s231
        %p233 = scmp.lt.s32.totalorder %s19, 1
        %s234 = scalar_select %p233, %s19, 1
        %s235 = smul.addr %s234, 4
        %s236 = smul.addr %s235, 4
        %s237 = scalar_lea.vmem %s0, %s236
        %p238 = scmp.lt.s32.totalorder %s19, 1
        %s239 = scalar_select %p238, %s19, 1
        %s240 = smul.addr %s239, 4
        %s241 = smul.addr %s240, 4
        %s242 = scalar_lea.vmem %s1, %s241
        %v244 = vld [vmem:[%s2] sm:$0xf]
        %v245 = vld [vmem:[%s2 + $0x4] sm:$0xf]
        %v246 = vld [vmem:[%s2 + $0x8] sm:$0xf]
        %v247 = vld [vmem:[%s2 + $0xc] sm:$0xf]
        %v248 = vld [vmem:[%s2 + $0x10] sm:$0xf]
        %v249 = vld [vmem:[%s2 + $0x14] sm:$0xf]
        %v250 = vld [vmem:[%s2 + $0x18] sm:$0xf]
        %v251 = vld [vmem:[%s2 + $0x1c] sm:$0xf]
        %v252 = vld [vmem:[%s2 + $0x20] sm:$0xf]
        %v253 = vld [vmem:[%s2 + $0x24] sm:$0xf]
        %v254 = vld [vmem:[%s2 + $0x28] sm:$0xf]
        %v255 = vld [vmem:[%s2 + $0x2c] sm:$0xf]
        %v256 = vld [vmem:[%s3] sm:$0xf]
        %v257 = vld [vmem:[%s3 + $0x4] sm:$0xf]
        %v258 = vld [vmem:[%s3 + $0x8] sm:$0xf]
        %v259 = vld [vmem:[%s3 + $0xc] sm:$0xf]
        %v260 = vld [vmem:[%s3 + $0x10] sm:$0xf]
        %v261 = vld [vmem:[%s3 + $0x14] sm:$0xf]
        %v262 = vld [vmem:[%s3 + $0x18] sm:$0xf]
        %v263 = vld [vmem:[%s3 + $0x1c] sm:$0xf]
        %v264 = vld [vmem:[%s3 + $0x20] sm:$0xf]
        %v265 = vld [vmem:[%s3 + $0x24] sm:$0xf]
        %v266 = vld [vmem:[%s3 + $0x28] sm:$0xf]
        %v267 = vld [vmem:[%s3 + $0x2c] sm:$0xf]
        %v268 = vld [vmem:[%s4] sm:$0xff]
        %v269 = vld [vmem:[%s4 + $0x8] sm:$0xff]
        %v270 = vld [vmem:[%s4 + $0x10] sm:$0xff]
        %v271 = vld [vmem:[%s4 + $0x18] sm:$0xff]
        %v272 = vld [vmem:[%s4 + $0x20] sm:$0xff]
        %v273 = vld [vmem:[%s4 + $0x28] sm:$0xff]
        %v274 = vld [vmem:[%s4 + $0x30] sm:$0xff]
        %v275 = vld [vmem:[%s4 + $0x38] sm:$0xff]
        %v276 = vld [vmem:[%s4 + $0x40] sm:$0xff]
        %v277 = vld [vmem:[%s4 + $0x48] sm:$0xff]
        %v278 = vld [vmem:[%s4 + $0x50] sm:$0xff]
        %v279 = vld [vmem:[%s4 + $0x58] sm:$0xff]
        %v280 = vld [vmem:[%s4 + $0x60] sm:$0xff]
        %v281 = vld [vmem:[%s4 + $0x68] sm:$0xff]
        %v282 = vld [vmem:[%s4 + $0x70] sm:$0xff]
        %v283 = vld [vmem:[%s4 + $0x78] sm:$0xff]
        %v284 = vld [vmem:[%s4 + $0x80] sm:$0xff]
        %v285 = vld [vmem:[%s4 + $0x88] sm:$0xff]
        %v286 = vld [vmem:[%s4 + $0x90] sm:$0xff]
        %v287 = vld [vmem:[%s4 + $0x98] sm:$0xff]
        %v288 = vld [vmem:[%s4 + $0xa0] sm:$0xff]
        %v289 = vld [vmem:[%s4 + $0xa8] sm:$0xff]
        %v290 = vld [vmem:[%s4 + $0xb0] sm:$0xff]
        %v291 = vld [vmem:[%s4 + $0xb8] sm:$0xff]
        %v292 = vld [vmem:[%s237] sm:$0xf]
        %v293 = vld [vmem:[%s237 + $0x4] sm:$0xf]
        %v294 = vld [vmem:[%s237 + $0x8] sm:$0xf]
        %v295 = vld [vmem:[%s237 + $0xc] sm:$0xf]
        %v296 = vld [vmem:[%s242] sm:$0xf]
        %v297 = vld [vmem:[%s242 + $0x4] sm:$0xf]
        %v298 = vld [vmem:[%s242 + $0x8] sm:$0xf]
        %v299 = vld [vmem:[%s242 + $0xc] sm:$0xf]
        %301 = vset.pattern.permute.xlu0 0
        %302 = vperm.xlu0 %301, %v268
        %v303 = vpop.permute.xlu0 %302
        %306 = vset.pattern.permute.xlu0 0
        %307 = vperm.xlu0 %306, %v269
        %v308 = vpop.permute.xlu0 %307
        %311 = vset.pattern.permute.xlu0 0
        %312 = vperm.xlu0 %311, %v270
        %v313 = vpop.permute.xlu0 %312
        %316 = vset.pattern.permute.xlu0 0
        %317 = vperm.xlu0 %316, %v271
        %v318 = vpop.permute.xlu0 %317
        %v324 = vunpack.c.l.b16 %v244
        %v325 = vunpack.c.l.b16 %v245
        %v326 = vunpack.c.l.b16 %v246
        %v327 = vunpack.c.l.b16 %v247
        %v328 = vpack.c.b16 %v325, %v324
        %v329 = vpack.c.b16 %v327, %v326
        %v334 = vunpack.c.l.b16 %v292
        %v335 = vunpack.c.l.b16 %v293
        %v336 = vunpack.c.l.b16 %v294
        %v337 = vunpack.c.l.b16 %v295
        %v338 = vpack.c.b16 %v335, %v334
        %v339 = vpack.c.b16 %v337, %v336
        %vm342 = vcmask 261120
        %v344 = vsel %vm342, %v328, 0
        %v347 = vsel %vm342, %v329, 0
        %349 = vmatprep.subr.bf16.mxu0 0
        %350 = vmatpush1.bf16.msra.mxu0 %v338
        %351 = vmatprep.subr.bf16.mxu0 0
        %352 = vmatpush1.bf16.msra.mxu0 %v339
        %353 = vmatprep.subr.bf16.mxu0 0
        %354 = vmatpush1.bf16.msra.mxu0 0
        %355 = vmatprep.subr.bf16.mxu0 0
        %356 = vmatpush1.bf16.msra.mxu0 0
        %357 = vmatprep.subr.bf16.mxu0 0
        %358 = vmatpush1.bf16.msra.mxu0 0
        %359 = vmatprep.subr.bf16.mxu0 0
        %360 = vmatpush1.bf16.msra.mxu0 0
        %361 = vmatprep.subr.bf16.mxu0 0
        %362 = vmatpush1.bf16.msra.mxu0 0
        %363 = vmatprep.subr.bf16.mxu0 0
        %364 = vmatpush1.bf16.msra.mxu0 0
        %365 = vmatprep.subr.bf16.mxu0 0
        %366 = vmatpush1.bf16.msra.mxu0 0
        %367 = vmatprep.subr.bf16.mxu0 0
        %368 = vmatpush1.bf16.msra.mxu0 0
        %369 = vmatprep.subr.bf16.mxu0 0
        %370 = vmatpush1.bf16.msra.mxu0 0
        %371 = vmatprep.subr.bf16.mxu0 0
        %372 = vmatpush1.bf16.msra.mxu0 0
        %373 = vmatprep.subr.bf16.mxu0 0
        %374 = vmatpush1.bf16.msra.mxu0 0
        %375 = vmatprep.subr.bf16.mxu0 0
        %376 = vmatpush1.bf16.msra.mxu0 0
        %377 = vmatprep.subr.bf16.mxu0 0
        %378 = vmatpush1.bf16.msra.mxu0 0
        %379 = vmatprep.subr.bf16.mxu0 0
        %380 = vmatpush1.bf16.msra.mxu0 0
        %381 = vmatprep.mubr.bf16.mxu0 0
        %382 = vmatmul.mubr.bf16.gmra.mrb[0].mxu0 %v344
        %v383 = vpop.f32.mrb[0].mxu0
        %v384 = vadd.f32 %v303, %v383
        %v385 = vpop.f32.mrb[0].mxu0
        %v386 = vpop.f32.mrb[0].mxu0
        %v387 = vadd.f32 %v308, %v386
        %v388 = vpop.f32.mrb[0].mxu0
        %389 = vmatprep.mubr.bf16.mxu0 0
        %390 = vmatmul.mubr.bf16.gmra.mrb[0].mxu0 %v347
        %v391 = vpop.f32.mrb[0].mxu0
        %v392 = vadd.f32 %v313, %v391
        %v393 = vpop.f32.mrb[0].mxu0
        %v394 = vpop.f32.mrb[0].mxu0
        %v395 = vadd.f32 %v318, %v394
        %v396 = vpop.f32.mrb[0].mxu0
        %397 = vdwg.mxu0
        %399 = vset.pattern.permute.xlu0 0
        %400 = vperm.xlu0 %399, %v272
        %v401 = vpop.permute.xlu0 %400
        %404 = vset.pattern.permute.xlu0 0
        %405 = vperm.xlu0 %404, %v273
        %v406 = vpop.permute.xlu0 %405
        %409 = vset.pattern.permute.xlu0 0
        %410 = vperm.xlu0 %409, %v274
        %v411 = vpop.permute.xlu0 %410
        %414 = vset.pattern.permute.xlu0 0
        %415 = vperm.xlu0 %414, %v275
        %v416 = vpop.permute.xlu0 %415
        %419 = vset.pattern.permute.xlu0 0
        %420 = vperm.xlu0 %419, %v276
        %v421 = vpop.permute.xlu0 %420
        %424 = vset.pattern.permute.xlu0 0
        %425 = vperm.xlu0 %424, %v277
        %v426 = vpop.permute.xlu0 %425
        %429 = vset.pattern.permute.xlu0 0
        %430 = vperm.xlu0 %429, %v278
        %v431 = vpop.permute.xlu0 %430
        %434 = vset.pattern.permute.xlu0 0
        %435 = vperm.xlu0 %434, %v279
        %v436 = vpop.permute.xlu0 %435
        %v446 = vunpack.c.l.b16 %v248
        %v447 = vunpack.c.l.b16 %v249
        %v448 = vunpack.c.l.b16 %v250
        %v449 = vunpack.c.l.b16 %v251
        %v450 = vunpack.c.l.b16 %v252
        %v451 = vunpack.c.l.b16 %v253
        %v452 = vunpack.c.l.b16 %v254
        %v453 = vunpack.c.l.b16 %v255
        %v454 = vpack.c.b16 %v447, %v446
        %v455 = vpack.c.b16 %v449, %v448
        %v456 = vpack.c.b16 %v451, %v450
        %v457 = vpack.c.b16 %v453, %v452
        %v462 = vunpack.c.l.b16 %v296
        %v463 = vunpack.c.l.b16 %v297
        %v464 = vunpack.c.l.b16 %v298
        %v465 = vunpack.c.l.b16 %v299
        %v466 = vpack.c.b16 %v463, %v462
        %v467 = vpack.c.b16 %v465, %v464
        %v471 = vsel %vm342, %v454, 0
        %v474 = vsel %vm342, %v455, 0
        %v477 = vsel %vm342, %v456, 0
        %v480 = vsel %vm342, %v457, 0
        %482 = vmatprep.subr.bf16.mxu0 0
        %483 = vmatpush1.bf16.msra.mxu0 %v466
        %484 = vmatprep.subr.bf16.mxu0 0
        %485 = vmatpush1.bf16.msra.mxu0 %v467
        %486 = vmatprep.subr.bf16.mxu0 0
        %487 = vmatpush1.bf16.msra.mxu0 0
        %488 = vmatprep.subr.bf16.mxu0 0
        %489 = vmatpush1.bf16.msra.mxu0 0
        %490 = vmatprep.subr.bf16.mxu0 0
        %491 = vmatpush1.bf16.msra.mxu0 0
        %492 = vmatprep.subr.bf16.mxu0 0
        %493 = vmatpush1.bf16.msra.mxu0 0
        %494 = vmatprep.subr.bf16.mxu0 0
        %495 = vmatpush1.bf16.msra.mxu0 0
        %496 = vmatprep.subr.bf16.mxu0 0
        %497 = vmatpush1.bf16.msra.mxu0 0
        %498 = vmatprep.subr.bf16.mxu0 0
        %499 = vmatpush1.bf16.msra.mxu0 0
        %500 = vmatprep.subr.bf16.mxu0 0
        %501 = vmatpush1.bf16.msra.mxu0 0
        %502 = vmatprep.subr.bf16.mxu0 0
        %503 = vmatpush1.bf16.msra.mxu0 0
        %504 = vmatprep.subr.bf16.mxu0 0
        %505 = vmatpush1.bf16.msra.mxu0 0
        %506 = vmatprep.subr.bf16.mxu0 0
        %507 = vmatpush1.bf16.msra.mxu0 0
        %508 = vmatprep.subr.bf16.mxu0 0
        %509 = vmatpush1.bf16.msra.mxu0 0
        %510 = vmatprep.subr.bf16.mxu0 0
        %511 = vmatpush1.bf16.msra.mxu0 0
        %512 = vmatprep.subr.bf16.mxu0 0
        %513 = vmatpush1.bf16.msra.mxu0 0
        %514 = vmatprep.mubr.bf16.mxu0 0
        %515 = vmatmul.mubr.bf16.gmra.mrb[0].mxu0 %v471
        %v516 = vpop.f32.mrb[0].mxu0
        %v517 = vadd.f32 %v401, %v516
        %v518 = vpop.f32.mrb[0].mxu0
        %v519 = vpop.f32.mrb[0].mxu0
        %v520 = vadd.f32 %v406, %v519
        %v521 = vpop.f32.mrb[0].mxu0
        %522 = vmatprep.mubr.bf16.mxu0 0
        %523 = vmatmul.mubr.bf16.gmra.mrb[0].mxu0 %v474
        %v524 = vpop.f32.mrb[0].mxu0
        %v525 = vadd.f32 %v411, %v524
        %v526 = vpop.f32.mrb[0].mxu0
        %v527 = vpop.f32.mrb[0].mxu0
        %v528 = vadd.f32 %v416, %v527
        %v529 = vpop.f32.mrb[0].mxu0
        %530 = vmatprep.mubr.bf16.mxu0 0
        %531 = vmatmul.mubr.bf16.gmra.mrb[0].mxu0 %v477
        %v532 = vpop.f32.mrb[0].mxu0
        %v533 = vadd.f32 %v421, %v532
        %v534 = vpop.f32.mrb[0].mxu0
        %v535 = vpop.f32.mrb[0].mxu0
        %v536 = vadd.f32 %v426, %v535
        %v537 = vpop.f32.mrb[0].mxu0
        %538 = vmatprep.mubr.bf16.mxu0 0
        %539 = vmatmul.mubr.bf16.gmra.mrb[0].mxu0 %v480
        %v540 = vpop.f32.mrb[0].mxu0
        %v541 = vadd.f32 %v431, %v540
        %v542 = vpop.f32.mrb[0].mxu0
        %v543 = vpop.f32.mrb[0].mxu0
        %v544 = vadd.f32 %v436, %v543
        %v545 = vpop.f32.mrb[0].mxu0
        %546 = vdwg.mxu0
        %v547 = vpack.c.bf16 %v384, %v384
        %v548 = vpack.c.bf16 %v387, %v387
        %v549 = vpack.c.bf16 %v392, %v392
        %v550 = vpack.c.bf16 %v395, %v395
        %v551 = vpack.c.bf16 %v517, %v517
        %v552 = vpack.c.bf16 %v520, %v520
        %v553 = vpack.c.bf16 %v525, %v525
        %v554 = vpack.c.bf16 %v528, %v528
        %v555 = vpack.c.bf16 %v533, %v533
        %v556 = vpack.c.bf16 %v536, %v536
        %v557 = vpack.c.bf16 %v541, %v541
        %v558 = vpack.c.bf16 %v544, %v544
        %559 = vxpose.xlu0.c.b16.start [1/8] %v547, 128
        %560 = vxpose.xlu0.c.b16.cont [2/8] 0, 128
        %561 = vxpose.xlu0.c.b16.cont [3/8] 0, 128
        %562 = vxpose.xlu0.c.b16.cont [4/8] 0, 128
        %563 = vxpose.xlu0.c.b16.cont [5/8] 0, 128
        %564 = vxpose.xlu0.c.b16.cont [6/8] 0, 128
        %565 = vxpose.xlu0.c.b16.cont [7/8] 0, 128
        %566 = vxpose.xlu0.c.b16.end [8/8] 0, 128
        %v567 = vpop.trf.xlu0
        %v568 = vpop.trf.xlu0
        %v569 = vpop.trf.xlu0
        %v570 = vpop.trf.xlu0
        %v571 = vpop.trf.xlu0
        %v572 = vpop.trf.xlu0
        %v573 = vpop.trf.xlu0
        %v574 = vpop.trf.xlu0
        %vm575 = vcmask 64512
        %v577 = vsel %vm575, %v567, 0
        %v580 = vsel %vm575, %v568, 0
        %v583 = vsel %vm575, %v569, 0
        %v586 = vsel %vm575, %v570, 0
        %v589 = vsel %vm575, %v571, 0
        %v592 = vsel %vm575, %v572, 0
        %v595 = vsel %vm575, %v573, 0
        %v598 = vsel %vm575, %v574, 0
        %vm600 = vcmask 1043456
        %v602 = vsel %vm600, %v551, 0
        %604 = vmatprep.subr.bf16.mxu0 0
        %605 = vmatpush1.bf16.msra.mxu0 %v602
        %606 = vmatprep.subr.bf16.mxu0 0
        %607 = vmatpush1.bf16.msra.mxu0 0
        %608 = vmatprep.subr.bf16.mxu0 0
        %609 = vmatpush1.bf16.msra.mxu0 0
        %610 = vmatprep.subr.bf16.mxu0 0
        %611 = vmatpush1.bf16.msra.mxu0 0
        %612 = vmatprep.subr.bf16.mxu0 0
        %613 = vmatpush1.bf16.msra.mxu0 0
        %614 = vmatprep.subr.bf16.mxu0 0
        %615 = vmatpush1.bf16.msra.mxu0 0
        %616 = vmatprep.subr.bf16.mxu0 0
        %617 = vmatpush1.bf16.msra.mxu0 0
        %618 = vmatprep.subr.bf16.mxu0 0
        %619 = vmatpush1.bf16.msra.mxu0 0
        %620 = vmatprep.subr.bf16.mxu0 0
        %621 = vmatpush1.bf16.msra.mxu0 0
        %622 = vmatprep.subr.bf16.mxu0 0
        %623 = vmatpush1.bf16.msra.mxu0 0
        %624 = vmatprep.subr.bf16.mxu0 0
        %625 = vmatpush1.bf16.msra.mxu0 0
        %626 = vmatprep.subr.bf16.mxu0 0
        %627 = vmatpush1.bf16.msra.mxu0 0
        %628 = vmatprep.subr.bf16.mxu0 0
        %629 = vmatpush1.bf16.msra.mxu0 0
        %630 = vmatprep.subr.bf16.mxu0 0
        %631 = vmatpush1.bf16.msra.mxu0 0
        %632 = vmatprep.subr.bf16.mxu0 0
        %633 = vmatpush1.bf16.msra.mxu0 0
        %634 = vmatprep.subr.bf16.mxu0 0
        %635 = vmatpush1.bf16.msra.mxu0 0
        %636 = vmatprep.mubr.bf16.mxu0 0
        %637 = vmatmul.mubr.bf16.gmra.mrb[0].mxu0 %v577
        %v638 = vpop.f32.mrb[0].mxu0
        %v639 = vadd.f32 0.0, %v638
        %v640 = vpop.f32.mrb[0].mxu0
        %v641 = vpop.f32.mrb[0].mxu0
        %v642 = vadd.f32 0.0, %v641
        %v643 = vpop.f32.mrb[0].mxu0
        %644 = vmatprep.mubr.bf16.mxu0 0
        %645 = vmatmul.mubr.bf16.gmra.mrb[0].mxu0 %v580
        %v646 = vpop.f32.mrb[0].mxu0
        %v647 = vadd.f32 0.0, %v646
        %v648 = vpop.f32.mrb[0].mxu0
        %v649 = vpop.f32.mrb[0].mxu0
        %v650 = vadd.f32 0.0, %v649
        %v651 = vpop.f32.mrb[0].mxu0
        %652 = vmatprep.mubr.bf16.mxu0 0
        %653 = vmatmul.mubr.bf16.gmra.mrb[0].mxu0 %v583
        %v654 = vpop.f32.mrb[0].mxu0
        %v655 = vadd.f32 0.0, %v654
        %v656 = vpop.f32.mrb[0].mxu0
        %v657 = vpop.f32.mrb[0].mxu0
        %v658 = vadd.f32 0.0, %v657
        %v659 = vpop.f32.mrb[0].mxu0
        %660 = vmatprep.mubr.bf16.mxu0 0
        %661 = vmatmul.mubr.bf16.gmra.mrb[0].mxu0 %v586
        %v662 = vpop.f32.mrb[0].mxu0
        %v663 = vadd.f32 0.0, %v662
        %v664 = vpop.f32.mrb[0].mxu0
        %v665 = vpop.f32.mrb[0].mxu0
        %v666 = vadd.f32 0.0, %v665
        %v667 = vpop.f32.mrb[0].mxu0
        %668 = vmatprep.mubr.bf16.mxu0 0
        %669 = vmatmul.mubr.bf16.gmra.mrb[0].mxu0 %v589
        %v670 = vpop.f32.mrb[0].mxu0
        %v671 = vadd.f32 0.0, %v670
        %v672 = vpop.f32.mrb[0].mxu0
        %v673 = vpop.f32.mrb[0].mxu0
        %v674 = vadd.f32 0.0, %v673
        %v675 = vpop.f32.mrb[0].mxu0
        %676 = vmatprep.mubr.bf16.mxu0 0
        %677 = vmatmul.mubr.bf16.gmra.mrb[0].mxu0 %v592
        %v678 = vpop.f32.mrb[0].mxu0
        %v679 = vadd.f32 0.0, %v678
        %v680 = vpop.f32.mrb[0].mxu0
        %v681 = vpop.f32.mrb[0].mxu0
        %v682 = vadd.f32 0.0, %v681
        %v683 = vpop.f32.mrb[0].mxu0
        %684 = vmatprep.mubr.bf16.mxu0 0
        %685 = vmatmul.mubr.bf16.gmra.mrb[0].mxu0 %v595
        %v686 = vpop.f32.mrb[0].mxu0
        %v687 = vadd.f32 0.0, %v686
        %v688 = vpop.f32.mrb[0].mxu0
        %v689 = vpop.f32.mrb[0].mxu0
        %v690 = vadd.f32 0.0, %v689
        %v691 = vpop.f32.mrb[0].mxu0
        %692 = vmatprep.mubr.bf16.mxu0 0
        %693 = vmatmul.mubr.bf16.gmra.mrb[0].mxu0 %v598
        %v694 = vpop.f32.mrb[0].mxu0
        %v695 = vadd.f32 0.0, %v694
        %v696 = vpop.f32.mrb[0].mxu0
        %v697 = vpop.f32.mrb[0].mxu0
        %v698 = vadd.f32 0.0, %v697
        %v699 = vpop.f32.mrb[0].mxu0
        %700 = vdwg.mxu0
        %701 = vxpose.xlu0.c.b16.start [1/8] %v548, 128
        %702 = vxpose.xlu0.c.b16.cont [2/8] 0, 128
        %703 = vxpose.xlu0.c.b16.cont [3/8] 0, 128
        %704 = vxpose.xlu0.c.b16.cont [4/8] 0, 128
        %705 = vxpose.xlu0.c.b16.cont [5/8] 0, 128
        %706 = vxpose.xlu0.c.b16.cont [6/8] 0, 128
        %707 = vxpose.xlu0.c.b16.cont [7/8] 0, 128
        %708 = vxpose.xlu0.c.b16.end [8/8] 0, 128
        %v709 = vpop.trf.xlu0
        %v710 = vpop.trf.xlu0
        %v711 = vpop.trf.xlu0
        %v712 = vpop.trf.xlu0
        %v713 = vpop.trf.xlu0
        %v714 = vpop.trf.xlu0
        %v715 = vpop.trf.xlu0
        %v716 = vpop.trf.xlu0
        %v718 = vsel %vm575, %v709, 0
        %v721 = vsel %vm575, %v710, 0
        %v724 = vsel %vm575, %v711, 0
        %v727 = vsel %vm575, %v712, 0
        %v730 = vsel %vm575, %v713, 0
        %v733 = vsel %vm575, %v714, 0
        %v736 = vsel %vm575, %v715, 0
        %v739 = vsel %vm575, %v716, 0
        %v742 = vsel %vm600, %v552, 0
        %744 = vmatprep.subr.bf16.mxu0 0
        %745 = vmatpush1.bf16.msra.mxu0 %v742
        %746 = vmatprep.subr.bf16.mxu0 0
        %747 = vmatpush1.bf16.msra.mxu0 0
        %748 = vmatprep.subr.bf16.mxu0 0
        %749 = vmatpush1.bf16.msra.mxu0 0
        %750 = vmatprep.subr.bf16.mxu0 0
        %751 = vmatpush1.bf16.msra.mxu0 0
        %752 = vmatprep.subr.bf16.mxu0 0
        %753 = vmatpush1.bf16.msra.mxu0 0
        %754 = vmatprep.subr.bf16.mxu0 0
        %755 = vmatpush1.bf16.msra.mxu0 0
        %756 = vmatprep.subr.bf16.mxu0 0
        %757 = vmatpush1.bf16.msra.mxu0 0
        %758 = vmatprep.subr.bf16.mxu0 0
        %759 = vmatpush1.bf16.msra.mxu0 0
        %760 = vmatprep.subr.bf16.mxu0 0
        %761 = vmatpush1.bf16.msra.mxu0 0
        %762 = vmatprep.subr.bf16.mxu0 0
        %763 = vmatpush1.bf16.msra.mxu0 0
        %764 = vmatprep.subr.bf16.mxu0 0
        %765 = vmatpush1.bf16.msra.mxu0 0
        %766 = vmatprep.subr.bf16.mxu0 0
        %767 = vmatpush1.bf16.msra.mxu0 0
        %768 = vmatprep.subr.bf16.mxu0 0
        %769 = vmatpush1.bf16.msra.mxu0 0
        %770 = vmatprep.subr.bf16.mxu0 0
        %771 = vmatpush1.bf16.msra.mxu0 0
        %772 = vmatprep.subr.bf16.mxu0 0
        %773 = vmatpush1.bf16.msra.mxu0 0
        %774 = vmatprep.subr.bf16.mxu0 0
        %775 = vmatpush1.bf16.msra.mxu0 0
        %776 = vmatprep.mubr.bf16.mxu0 0
        %777 = vmatmul.mubr.bf16.gmra.mrb[0].mxu0 %v718
        %v778 = vpop.f32.mrb[0].mxu0
        %v779 = vadd.f32 0.0, %v778
        %v780 = vpop.f32.mrb[0].mxu0
        %v781 = vpop.f32.mrb[0].mxu0
        %v782 = vadd.f32 0.0, %v781
        %v783 = vpop.f32.mrb[0].mxu0
        %784 = vmatprep.mubr.bf16.mxu0 0
        %785 = vmatmul.mubr.bf16.gmra.mrb[0].mxu0 %v721
        %v786 = vpop.f32.mrb[0].mxu0
        %v787 = vadd.f32 0.0, %v786
        %v788 = vpop.f32.mrb[0].mxu0
        %v789 = vpop.f32.mrb[0].mxu0
        %v790 = vadd.f32 0.0, %v789
        %v791 = vpop.f32.mrb[0].mxu0
        %792 = vmatprep.mubr.bf16.mxu0 0
        %793 = vmatmul.mubr.bf16.gmra.mrb[0].mxu0 %v724
        %v794 = vpop.f32.mrb[0].mxu0
        %v795 = vadd.f32 0.0, %v794
        %v796 = vpop.f32.mrb[0].mxu0
        %v797 = vpop.f32.mrb[0].mxu0
        %v798 = vadd.f32 0.0, %v797
        %v799 = vpop.f32.mrb[0].mxu0
        %800 = vmatprep.mubr.bf16.mxu0 0
        %801 = vmatmul.mubr.bf16.gmra.mrb[0].mxu0 %v727
        %v802 = vpop.f32.mrb[0].mxu0
        %v803 = vadd.f32 0.0, %v802
        %v804 = vpop.f32.mrb[0].mxu0
        %v805 = vpop.f32.mrb[0].mxu0
        %v806 = vadd.f32 0.0, %v805
        %v807 = vpop.f32.mrb[0].mxu0
        %808 = vmatprep.mubr.bf16.mxu0 0
        %809 = vmatmul.mubr.bf16.gmra.mrb[0].mxu0 %v730
        %v810 = vpop.f32.mrb[0].mxu0
        %v811 = vadd.f32 0.0, %v810
        %v812 = vpop.f32.mrb[0].mxu0
        %v813 = vpop.f32.mrb[0].mxu0
        %v814 = vadd.f32 0.0, %v813
        %v815 = vpop.f32.mrb[0].mxu0
        %816 = vmatprep.mubr.bf16.mxu0 0
        %817 = vmatmul.mubr.bf16.gmra.mrb[0].mxu0 %v733
        %v818 = vpop.f32.mrb[0].mxu0
        %v819 = vadd.f32 0.0, %v818
        %v820 = vpop.f32.mrb[0].mxu0
        %v821 = vpop.f32.mrb[0].mxu0
        %v822 = vadd.f32 0.0, %v821
        %v823 = vpop.f32.mrb[0].mxu0
        %824 = vmatprep.mubr.bf16.mxu0 0
        %825 = vmatmul.mubr.bf16.gmra.mrb[0].mxu0 %v736
        %v826 = vpop.f32.mrb[0].mxu0
        %v827 = vadd.f32 0.0, %v826
        %v828 = vpop.f32.mrb[0].mxu0
        %v829 = vpop.f32.mrb[0].mxu0
        %v830 = vadd.f32 0.0, %v829
        %v831 = vpop.f32.mrb[0].mxu0
        %832 = vmatprep.mubr.bf16.mxu0 0
        %833 = vmatmul.mubr.bf16.gmra.mrb[0].mxu0 %v739
        %v834 = vpop.f32.mrb[0].mxu0
        %v835 = vadd.f32 0.0, %v834
        %v836 = vpop.f32.mrb[0].mxu0
        %v837 = vpop.f32.mrb[0].mxu0
        %v838 = vadd.f32 0.0, %v837
        %v839 = vpop.f32.mrb[0].mxu0
        %840 = vdwg.mxu0
        %841 = vxpose.xlu0.c.b16.start [1/8] %v549, 128
        %842 = vxpose.xlu0.c.b16.cont [2/8] 0, 128
        %843 = vxpose.xlu0.c.b16.cont [3/8] 0, 128
        %844 = vxpose.xlu0.c.b16.cont [4/8] 0, 128
        %845 = vxpose.xlu0.c.b16.cont [5/8] 0, 128
        %846 = vxpose.xlu0.c.b16.cont [6/8] 0, 128
        %847 = vxpose.xlu0.c.b16.cont [7/8] 0, 128
        %848 = vxpose.xlu0.c.b16.end [8/8] 0, 128
        %v849 = vpop.trf.xlu0
        %v850 = vpop.trf.xlu0
        %v851 = vpop.trf.xlu0
        %v852 = vpop.trf.xlu0
        %v853 = vpop.trf.xlu0
        %v854 = vpop.trf.xlu0
        %v855 = vpop.trf.xlu0
        %v856 = vpop.trf.xlu0
        %v858 = vsel %vm575, %v849, 0
        %v861 = vsel %vm575, %v850, 0
        %v864 = vsel %vm575, %v851, 0
        %v867 = vsel %vm575, %v852, 0
        %v870 = vsel %vm575, %v853, 0
        %v873 = vsel %vm575, %v854, 0
        %v876 = vsel %vm575, %v855, 0
        %v879 = vsel %vm575, %v856, 0
        %v882 = vsel %vm600, %v553, 0
        %884 = vmatprep.subr.bf16.mxu0 0
        %885 = vmatpush1.bf16.msra.mxu0 %v882
        %886 = vmatprep.subr.bf16.mxu0 0
        %887 = vmatpush1.bf16.msra.mxu0 0
        %888 = vmatprep.subr.bf16.mxu0 0
        %889 = vmatpush1.bf16.msra.mxu0 0
        %890 = vmatprep.subr.bf16.mxu0 0
        %891 = vmatpush1.bf16.msra.mxu0 0
        %892 = vmatprep.subr.bf16.mxu0 0
        %893 = vmatpush1.bf16.msra.mxu0 0
        %894 = vmatprep.subr.bf16.mxu0 0
        %895 = vmatpush1.bf16.msra.mxu0 0
        %896 = vmatprep.subr.bf16.mxu0 0
        %897 = vmatpush1.bf16.msra.mxu0 0
        %898 = vmatprep.subr.bf16.mxu0 0
        %899 = vmatpush1.bf16.msra.mxu0 0
        %900 = vmatprep.subr.bf16.mxu0 0
        %901 = vmatpush1.bf16.msra.mxu0 0
        %902 = vmatprep.subr.bf16.mxu0 0
        %903 = vmatpush1.bf16.msra.mxu0 0
        %904 = vmatprep.subr.bf16.mxu0 0
        %905 = vmatpush1.bf16.msra.mxu0 0
        %906 = vmatprep.subr.bf16.mxu0 0
        %907 = vmatpush1.bf16.msra.mxu0 0
        %908 = vmatprep.subr.bf16.mxu0 0
        %909 = vmatpush1.bf16.msra.mxu0 0
        %910 = vmatprep.subr.bf16.mxu0 0
        %911 = vmatpush1.bf16.msra.mxu0 0
        %912 = vmatprep.subr.bf16.mxu0 0
        %913 = vmatpush1.bf16.msra.mxu0 0
        %914 = vmatprep.subr.bf16.mxu0 0
        %915 = vmatpush1.bf16.msra.mxu0 0
        %916 = vmatprep.mubr.bf16.mxu0 0
        %917 = vmatmul.mubr.bf16.gmra.mrb[0].mxu0 %v858
        %v918 = vpop.f32.mrb[0].mxu0
        %v919 = vadd.f32 0.0, %v918
        %v920 = vpop.f32.mrb[0].mxu0
        %v921 = vpop.f32.mrb[0].mxu0
        %v922 = vadd.f32 0.0, %v921
        %v923 = vpop.f32.mrb[0].mxu0
        %924 = vmatprep.mubr.bf16.mxu0 0
        %925 = vmatmul.mubr.bf16.gmra.mrb[0].mxu0 %v861
        %v926 = vpop.f32.mrb[0].mxu0
        %v927 = vadd.f32 0.0, %v926
        %v928 = vpop.f32.mrb[0].mxu0
        %v929 = vpop.f32.mrb[0].mxu0
        %v930 = vadd.f32 0.0, %v929
        %v931 = vpop.f32.mrb[0].mxu0
        %932 = vmatprep.mubr.bf16.mxu0 0
        %933 = vmatmul.mubr.bf16.gmra.mrb[0].mxu0 %v864
        %v934 = vpop.f32.mrb[0].mxu0
        %v935 = vadd.f32 0.0, %v934
        %v936 = vpop.f32.mrb[0].mxu0
        %v937 = vpop.f32.mrb[0].mxu0
        %v938 = vadd.f32 0.0, %v937
        %v939 = vpop.f32.mrb[0].mxu0
        %940 = vmatprep.mubr.bf16.mxu0 0
        %941 = vmatmul.mubr.bf16.gmra.mrb[0].mxu0 %v867
        %v942 = vpop.f32.mrb[0].mxu0
        %v943 = vadd.f32 0.0, %v942
        %v944 = vpop.f32.mrb[0].mxu0
        %v945 = vpop.f32.mrb[0].mxu0
        %v946 = vadd.f32 0.0, %v945
        %v947 = vpop.f32.mrb[0].mxu0
        %948 = vmatprep.mubr.bf16.mxu0 0
        %949 = vmatmul.mubr.bf16.gmra.mrb[0].mxu0 %v870
        %v950 = vpop.f32.mrb[0].mxu0
        %v951 = vadd.f32 0.0, %v950
        %v952 = vpop.f32.mrb[0].mxu0
        %v953 = vpop.f32.mrb[0].mxu0
        %v954 = vadd.f32 0.0, %v953
        %v955 = vpop.f32.mrb[0].mxu0
        %956 = vmatprep.mubr.bf16.mxu0 0
        %957 = vmatmul.mubr.bf16.gmra.mrb[0].mxu0 %v873
        %v958 = vpop.f32.mrb[0].mxu0
        %v959 = vadd.f32 0.0, %v958
        %v960 = vpop.f32.mrb[0].mxu0
        %v961 = vpop.f32.mrb[0].mxu0
        %v962 = vadd.f32 0.0, %v961
        %v963 = vpop.f32.mrb[0].mxu0
        %964 = vmatprep.mubr.bf16.mxu0 0
        %965 = vmatmul.mubr.bf16.gmra.mrb[0].mxu0 %v876
        %v966 = vpop.f32.mrb[0].mxu0
        %v967 = vadd.f32 0.0, %v966
        %v968 = vpop.f32.mrb[0].mxu0
        %v969 = vpop.f32.mrb[0].mxu0
        %v970 = vadd.f32 0.0, %v969
        %v971 = vpop.f32.mrb[0].mxu0
        %972 = vmatprep.mubr.bf16.mxu0 0
        %973 = vmatmul.mubr.bf16.gmra.mrb[0].mxu0 %v879
        %v974 = vpop.f32.mrb[0].mxu0
        %v975 = vadd.f32 0.0, %v974
        %v976 = vpop.f32.mrb[0].mxu0
        %v977 = vpop.f32.mrb[0].mxu0
        %v978 = vadd.f32 0.0, %v977
        %v979 = vpop.f32.mrb[0].mxu0
        %980 = vdwg.mxu0
        %981 = vxpose.xlu0.c.b16.start [1/8] %v550, 128
        %982 = vxpose.xlu0.c.b16.cont [2/8] 0, 128
        %983 = vxpose.xlu0.c.b16.cont [3/8] 0, 128
        %984 = vxpose.xlu0.c.b16.cont [4/8] 0, 128
        %985 = vxpose.xlu0.c.b16.cont [5/8] 0, 128
        %986 = vxpose.xlu0.c.b16.cont [6/8] 0, 128
        %987 = vxpose.xlu0.c.b16.cont [7/8] 0, 128
        %988 = vxpose.xlu0.c.b16.end [8/8] 0, 128
        %v989 = vpop.trf.xlu0
        %v990 = vpop.trf.xlu0
        %v991 = vpop.trf.xlu0
        %v992 = vpop.trf.xlu0
        %v993 = vpop.trf.xlu0
        %v994 = vpop.trf.xlu0
        %v995 = vpop.trf.xlu0
        %v996 = vpop.trf.xlu0
        %v998 = vsel %vm575, %v989, 0
        %v1001 = vsel %vm575, %v990, 0
        %v1004 = vsel %vm575, %v991, 0
        %v1007 = vsel %vm575, %v992, 0
        %v1010 = vsel %vm575, %v993, 0
        %v1013 = vsel %vm575, %v994, 0
        %v1016 = vsel %vm575, %v995, 0
        %v1019 = vsel %vm575, %v996, 0
        %v1022 = vsel %vm600, %v554, 0
        %1024 = vmatprep.subr.bf16.mxu0 0
        %1025 = vmatpush1.bf16.msra.mxu0 %v1022
        %1026 = vmatprep.subr.bf16.mxu0 0
        %1027 = vmatpush1.bf16.msra.mxu0 0
        %1028 = vmatprep.subr.bf16.mxu0 0
        %1029 = vmatpush1.bf16.msra.mxu0 0
        %1030 = vmatprep.subr.bf16.mxu0 0
        %1031 = vmatpush1.bf16.msra.mxu0 0
        %1032 = vmatprep.subr.bf16.mxu0 0
        %1033 = vmatpush1.bf16.msra.mxu0 0
        %1034 = vmatprep.subr.bf16.mxu0 0
        %1035 = vmatpush1.bf16.msra.mxu0 0
        %1036 = vmatprep.subr.bf16.mxu0 0
        %1037 = vmatpush1.bf16.msra.mxu0 0
        %1038 = vmatprep.subr.bf16.mxu0 0
        %1039 = vmatpush1.bf16.msra.mxu0 0
        %1040 = vmatprep.subr.bf16.mxu0 0
        %1041 = vmatpush1.bf16.msra.mxu0 0
        %1042 = vmatprep.subr.bf16.mxu0 0
        %1043 = vmatpush1.bf16.msra.mxu0 0
        %1044 = vmatprep.subr.bf16.mxu0 0
        %1045 = vmatpush1.bf16.msra.mxu0 0
        %1046 = vmatprep.subr.bf16.mxu0 0
        %1047 = vmatpush1.bf16.msra.mxu0 0
        %1048 = vmatprep.subr.bf16.mxu0 0
        %1049 = vmatpush1.bf16.msra.mxu0 0
        %1050 = vmatprep.subr.bf16.mxu0 0
        %1051 = vmatpush1.bf16.msra.mxu0 0
        %1052 = vmatprep.subr.bf16.mxu0 0
        %1053 = vmatpush1.bf16.msra.mxu0 0
        %1054 = vmatprep.subr.bf16.mxu0 0
        %1055 = vmatpush1.bf16.msra.mxu0 0
        %1056 = vmatprep.mubr.bf16.mxu0 0
        %1057 = vmatmul.mubr.bf16.gmra.mrb[0].mxu0 %v998
        %v1058 = vpop.f32.mrb[0].mxu0
        %v1059 = vadd.f32 0.0, %v1058
        %v1060 = vpop.f32.mrb[0].mxu0
        %v1061 = vpop.f32.mrb[0].mxu0
        %v1062 = vadd.f32 0.0, %v1061
        %v1063 = vpop.f32.mrb[0].mxu0
        %1064 = vmatprep.mubr.bf16.mxu0 0
        %1065 = vmatmul.mubr.bf16.gmra.mrb[0].mxu0 %v1001
        %v1066 = vpop.f32.mrb[0].mxu0
        %v1067 = vadd.f32 0.0, %v1066
        %v1068 = vpop.f32.mrb[0].mxu0
        %v1069 = vpop.f32.mrb[0].mxu0
        %v1070 = vadd.f32 0.0, %v1069
        %v1071 = vpop.f32.mrb[0].mxu0
        %1072 = vmatprep.mubr.bf16.mxu0 0
        %1073 = vmatmul.mubr.bf16.gmra.mrb[0].mxu0 %v1004
        %v1074 = vpop.f32.mrb[0].mxu0
        %v1075 = vadd.f32 0.0, %v1074
        %v1076 = vpop.f32.mrb[0].mxu0
        %v1077 = vpop.f32.mrb[0].mxu0
        %v1078 = vadd.f32 0.0, %v1077
        %v1079 = vpop.f32.mrb[0].mxu0
        %1080 = vmatprep.mubr.bf16.mxu0 0
        %1081 = vmatmul.mubr.bf16.gmra.mrb[0].mxu0 %v1007
        %v1082 = vpop.f32.mrb[0].mxu0
        %v1083 = vadd.f32 0.0, %v1082
        %v1084 = vpop.f32.mrb[0].mxu0
        %v1085 = vpop.f32.mrb[0].mxu0
        %v1086 = vadd.f32 0.0, %v1085
        %v1087 = vpop.f32.mrb[0].mxu0
        %1088 = vmatprep.mubr.bf16.mxu0 0
        %1089 = vmatmul.mubr.bf16.gmra.mrb[0].mxu0 %v1010
        %v1090 = vpop.f32.mrb[0].mxu0
        %v1091 = vadd.f32 0.0, %v1090
        %v1092 = vpop.f32.mrb[0].mxu0
        %v1093 = vpop.f32.mrb[0].mxu0
        %v1094 = vadd.f32 0.0, %v1093
        %v1095 = vpop.f32.mrb[0].mxu0
        %1096 = vmatprep.mubr.bf16.mxu0 0
        %1097 = vmatmul.mubr.bf16.gmra.mrb[0].mxu0 %v1013
        %v1098 = vpop.f32.mrb[0].mxu0
        %v1099 = vadd.f32 0.0, %v1098
        %v1100 = vpop.f32.mrb[0].mxu0
        %v1101 = vpop.f32.mrb[0].mxu0
        %v1102 = vadd.f32 0.0, %v1101
        %v1103 = vpop.f32.mrb[0].mxu0
        %1104 = vmatprep.mubr.bf16.mxu0 0
        %1105 = vmatmul.mubr.bf16.gmra.mrb[0].mxu0 %v1016
        %v1106 = vpop.f32.mrb[0].mxu0
        %v1107 = vadd.f32 0.0, %v1106
        %v1108 = vpop.f32.mrb[0].mxu0
        %v1109 = vpop.f32.mrb[0].mxu0
        %v1110 = vadd.f32 0.0, %v1109
        %v1111 = vpop.f32.mrb[0].mxu0
        %1112 = vmatprep.mubr.bf16.mxu0 0
        %1113 = vmatmul.mubr.bf16.gmra.mrb[0].mxu0 %v1019
        %v1114 = vpop.f32.mrb[0].mxu0
        %v1115 = vadd.f32 0.0, %v1114
        %v1116 = vpop.f32.mrb[0].mxu0
        %v1117 = vpop.f32.mrb[0].mxu0
        %v1118 = vadd.f32 0.0, %v1117
        %v1119 = vpop.f32.mrb[0].mxu0
        %1120 = vdwg.mxu0
        %vm1121 = vcmask 523264
        %v1122 = vsel %vm1121, %v639, -inf
        %1123 = vmax.xlane.f32.xlu0 %v1122
        %v1124 = vpop.xlane.xlu0 %1123
        %v1125 = vsel %vm1121, %v642, -inf
        %1126 = vmax.xlane.f32.xlu0 %v1125
        %v1127 = vpop.xlane.xlu0 %1126
        %v1128 = vsel %vm1121, %v647, -inf
        %1129 = vmax.xlane.f32.xlu0 %v1128
        %v1130 = vpop.xlane.xlu0 %1129
        %v1131 = vsel %vm1121, %v650, -inf
        %1132 = vmax.xlane.f32.xlu0 %v1131
        %v1133 = vpop.xlane.xlu0 %1132
        %v1134 = vsel %vm1121, %v655, -inf
        %1135 = vmax.xlane.f32.xlu0 %v1134
        %v1136 = vpop.xlane.xlu0 %1135
        %v1137 = vsel %vm1121, %v658, -inf
        %1138 = vmax.xlane.f32.xlu0 %v1137
        %v1139 = vpop.xlane.xlu0 %1138
        %v1140 = vsel %vm1121, %v663, -inf
        %1141 = vmax.xlane.f32.xlu0 %v1140
        %v1142 = vpop.xlane.xlu0 %1141
        %v1143 = vsel %vm1121, %v666, -inf
        %1144 = vmax.xlane.f32.xlu0 %v1143
        %v1145 = vpop.xlane.xlu0 %1144
        %v1146 = vsel %vm1121, %v671, -inf
        %1147 = vmax.xlane.f32.xlu0 %v1146
        %v1148 = vpop.xlane.xlu0 %1147
        %v1149 = vsel %vm1121, %v674, -inf
        %1150 = vmax.xlane.f32.xlu0 %v1149
        %v1151 = vpop.xlane.xlu0 %1150
        %v1152 = vsel %vm1121, %v679, -inf
        %1153 = vmax.xlane.f32.xlu0 %v1152
        %v1154 = vpop.xlane.xlu0 %1153
        %v1155 = vsel %vm1121, %v682, -inf
        %1156 = vmax.xlane.f32.xlu0 %v1155
        %v1157 = vpop.xlane.xlu0 %1156
        %v1158 = vsel %vm1121, %v687, -inf
        %1159 = vmax.xlane.f32.xlu0 %v1158
        %v1160 = vpop.xlane.xlu0 %1159
        %v1161 = vsel %vm1121, %v690, -inf
        %1162 = vmax.xlane.f32.xlu0 %v1161
        %v1163 = vpop.xlane.xlu0 %1162
        %v1164 = vsel %vm1121, %v695, -inf
        %1165 = vmax.xlane.f32.xlu0 %v1164
        %v1166 = vpop.xlane.xlu0 %1165
        %v1167 = vsel %vm1121, %v698, -inf
        %1168 = vmax.xlane.f32.xlu0 %v1167
        %v1169 = vpop.xlane.xlu0 %1168
        %v1170 = vsel %vm1121, %v779, -inf
        %1171 = vmax.xlane.f32.xlu0 %v1170
        %v1172 = vpop.xlane.xlu0 %1171
        %v1173 = vsel %vm1121, %v782, -inf
        %1174 = vmax.xlane.f32.xlu0 %v1173
        %v1175 = vpop.xlane.xlu0 %1174
        %v1176 = vsel %vm1121, %v787, -inf
        %1177 = vmax.xlane.f32.xlu0 %v1176
        %v1178 = vpop.xlane.xlu0 %1177
        %v1179 = vsel %vm1121, %v790, -inf
        %1180 = vmax.xlane.f32.xlu0 %v1179
        %v1181 = vpop.xlane.xlu0 %1180
        %v1182 = vsel %vm1121, %v795, -inf
        %1183 = vmax.xlane.f32.xlu0 %v1182
        %v1184 = vpop.xlane.xlu0 %1183
        %v1185 = vsel %vm1121, %v798, -inf
        %1186 = vmax.xlane.f32.xlu0 %v1185
        %v1187 = vpop.xlane.xlu0 %1186
        %v1188 = vsel %vm1121, %v803, -inf
        %1189 = vmax.xlane.f32.xlu0 %v1188
        %v1190 = vpop.xlane.xlu0 %1189
        %v1191 = vsel %vm1121, %v806, -inf
        %1192 = vmax.xlane.f32.xlu0 %v1191
        %v1193 = vpop.xlane.xlu0 %1192
        %v1194 = vsel %vm1121, %v811, -inf
        %1195 = vmax.xlane.f32.xlu0 %v1194
        %v1196 = vpop.xlane.xlu0 %1195
        %v1197 = vsel %vm1121, %v814, -inf
        %1198 = vmax.xlane.f32.xlu0 %v1197
        %v1199 = vpop.xlane.xlu0 %1198
        %v1200 = vsel %vm1121, %v819, -inf
        %1201 = vmax.xlane.f32.xlu0 %v1200
        %v1202 = vpop.xlane.xlu0 %1201
        %v1203 = vsel %vm1121, %v822, -inf
        %1204 = vmax.xlane.f32.xlu0 %v1203
        %v1205 = vpop.xlane.xlu0 %1204
        %v1206 = vsel %vm1121, %v827, -inf
        %1207 = vmax.xlane.f32.xlu0 %v1206
        %v1208 = vpop.xlane.xlu0 %1207
        %v1209 = vsel %vm1121, %v830, -inf
        %1210 = vmax.xlane.f32.xlu0 %v1209
        %v1211 = vpop.xlane.xlu0 %1210
        %v1212 = vsel %vm1121, %v835, -inf
        %1213 = vmax.xlane.f32.xlu0 %v1212
        %v1214 = vpop.xlane.xlu0 %1213
        %v1215 = vsel %vm1121, %v838, -inf
        %1216 = vmax.xlane.f32.xlu0 %v1215
        %v1217 = vpop.xlane.xlu0 %1216
        %v1218 = vsel %vm1121, %v919, -inf
        %1219 = vmax.xlane.f32.xlu0 %v1218
        %v1220 = vpop.xlane.xlu0 %1219
        %v1221 = vsel %vm1121, %v922, -inf
        %1222 = vmax.xlane.f32.xlu0 %v1221
        %v1223 = vpop.xlane.xlu0 %1222
        %v1224 = vsel %vm1121, %v927, -inf
        %1225 = vmax.xlane.f32.xlu0 %v1224
        %v1226 = vpop.xlane.xlu0 %1225
        %v1227 = vsel %vm1121, %v930, -inf
        %1228 = vmax.xlane.f32.xlu0 %v1227
        %v1229 = vpop.xlane.xlu0 %1228
        %v1230 = vsel %vm1121, %v935, -inf
        %1231 = vmax.xlane.f32.xlu0 %v1230
        %v1232 = vpop.xlane.xlu0 %1231
        %v1233 = vsel %vm1121, %v938, -inf
        %1234 = vmax.xlane.f32.xlu0 %v1233
        %v1235 = vpop.xlane.xlu0 %1234
        %v1236 = vsel %vm1121, %v943, -inf
        %1237 = vmax.xlane.f32.xlu0 %v1236
        %v1238 = vpop.xlane.xlu0 %1237
        %v1239 = vsel %vm1121, %v946, -inf
        %1240 = vmax.xlane.f32.xlu0 %v1239
        %v1241 = vpop.xlane.xlu0 %1240
        %v1242 = vsel %vm1121, %v951, -inf
        %1243 = vmax.xlane.f32.xlu0 %v1242
        %v1244 = vpop.xlane.xlu0 %1243
        %v1245 = vsel %vm1121, %v954, -inf
        %1246 = vmax.xlane.f32.xlu0 %v1245
        %v1247 = vpop.xlane.xlu0 %1246
        %v1248 = vsel %vm1121, %v959, -inf
        %1249 = vmax.xlane.f32.xlu0 %v1248
        %v1250 = vpop.xlane.xlu0 %1249
        %v1251 = vsel %vm1121, %v962, -inf
        %1252 = vmax.xlane.f32.xlu0 %v1251
        %v1253 = vpop.xlane.xlu0 %1252
        %v1254 = vsel %vm1121, %v967, -inf
        %1255 = vmax.xlane.f32.xlu0 %v1254
        %v1256 = vpop.xlane.xlu0 %1255
        %v1257 = vsel %vm1121, %v970, -inf
        %1258 = vmax.xlane.f32.xlu0 %v1257
        %v1259 = vpop.xlane.xlu0 %1258
        %v1260 = vsel %vm1121, %v975, -inf
        %1261 = vmax.xlane.f32.xlu0 %v1260
        %v1262 = vpop.xlane.xlu0 %1261
        %v1263 = vsel %vm1121, %v978, -inf
        %1264 = vmax.xlane.f32.xlu0 %v1263
        %v1265 = vpop.xlane.xlu0 %1264
        %v1266 = vsel %vm1121, %v1059, -inf
        %1267 = vmax.xlane.f32.xlu0 %v1266
        %v1268 = vpop.xlane.xlu0 %1267
        %v1269 = vsel %vm1121, %v1062, -inf
        %1270 = vmax.xlane.f32.xlu0 %v1269
        %v1271 = vpop.xlane.xlu0 %1270
        %v1272 = vsel %vm1121, %v1067, -inf
        %1273 = vmax.xlane.f32.xlu0 %v1272
        %v1274 = vpop.xlane.xlu0 %1273
        %v1275 = vsel %vm1121, %v1070, -inf
        %1276 = vmax.xlane.f32.xlu0 %v1275
        %v1277 = vpop.xlane.xlu0 %1276
        %v1278 = vsel %vm1121, %v1075, -inf
        %1279 = vmax.xlane.f32.xlu0 %v1278
        %v1280 = vpop.xlane.xlu0 %1279
        %v1281 = vsel %vm1121, %v1078, -inf
        %1282 = vmax.xlane.f32.xlu0 %v1281
        %v1283 = vpop.xlane.xlu0 %1282
        %v1284 = vsel %vm1121, %v1083, -inf
        %1285 = vmax.xlane.f32.xlu0 %v1284
        %v1286 = vpop.xlane.xlu0 %1285
        %v1287 = vsel %vm1121, %v1086, -inf
        %1288 = vmax.xlane.f32.xlu0 %v1287
        %v1289 = vpop.xlane.xlu0 %1288
        %v1290 = vsel %vm1121, %v1091, -inf
        %1291 = vmax.xlane.f32.xlu0 %v1290
        %v1292 = vpop.xlane.xlu0 %1291
        %v1293 = vsel %vm1121, %v1094, -inf
        %1294 = vmax.xlane.f32.xlu0 %v1293
        %v1295 = vpop.xlane.xlu0 %1294
        %v1296 = vsel %vm1121, %v1099, -inf
        %1297 = vmax.xlane.f32.xlu0 %v1296
        %v1298 = vpop.xlane.xlu0 %1297
        %v1299 = vsel %vm1121, %v1102, -inf
        %1300 = vmax.xlane.f32.xlu0 %v1299
        %v1301 = vpop.xlane.xlu0 %1300
        %v1302 = vsel %vm1121, %v1107, -inf
        %1303 = vmax.xlane.f32.xlu0 %v1302
        %v1304 = vpop.xlane.xlu0 %1303
        %v1305 = vsel %vm1121, %v1110, -inf
        %1306 = vmax.xlane.f32.xlu0 %v1305
        %v1307 = vpop.xlane.xlu0 %1306
        %v1308 = vsel %vm1121, %v1115, -inf
        %1309 = vmax.xlane.f32.xlu0 %v1308
        %v1310 = vpop.xlane.xlu0 %1309
        %v1311 = vsel %vm1121, %v1118, -inf
        %1312 = vmax.xlane.f32.xlu0 %v1311
        %v1313 = vpop.xlane.xlu0 %1312
        %v1314 = vsub.f32 %v639, %v1124
        %v1315 = vsub.f32 %v642, %v1127
        %v1316 = vsub.f32 %v647, %v1130
        %v1317 = vsub.f32 %v650, %v1133
        %v1318 = vsub.f32 %v655, %v1136
        %v1319 = vsub.f32 %v658, %v1139
        %v1320 = vsub.f32 %v663, %v1142
        %v1321 = vsub.f32 %v666, %v1145
        %v1322 = vsub.f32 %v671, %v1148
        %v1323 = vsub.f32 %v674, %v1151
        %v1324 = vsub.f32 %v679, %v1154
        %v1325 = vsub.f32 %v682, %v1157
        %v1326 = vsub.f32 %v687, %v1160
        %v1327 = vsub.f32 %v690, %v1163
        %v1328 = vsub.f32 %v695, %v1166
        %v1329 = vsub.f32 %v698, %v1169
        %v1330 = vsub.f32 %v779, %v1172
        %v1331 = vsub.f32 %v782, %v1175
        %v1332 = vsub.f32 %v787, %v1178
        %v1333 = vsub.f32 %v790, %v1181
        %v1334 = vsub.f32 %v795, %v1184
        %v1335 = vsub.f32 %v798, %v1187
        %v1336 = vsub.f32 %v803, %v1190
        %v1337 = vsub.f32 %v806, %v1193
        %v1338 = vsub.f32 %v811, %v1196
        %v1339 = vsub.f32 %v814, %v1199
        %v1340 = vsub.f32 %v819, %v1202
        %v1341 = vsub.f32 %v822, %v1205
        %v1342 = vsub.f32 %v827, %v1208
        %v1343 = vsub.f32 %v830, %v1211
        %v1344 = vsub.f32 %v835, %v1214
        %v1345 = vsub.f32 %v838, %v1217
        %v1346 = vsub.f32 %v919, %v1220
        %v1347 = vsub.f32 %v922, %v1223
        %v1348 = vsub.f32 %v927, %v1226
        %v1349 = vsub.f32 %v930, %v1229
        %v1350 = vsub.f32 %v935, %v1232
        %v1351 = vsub.f32 %v938, %v1235
        %v1352 = vsub.f32 %v943, %v1238
        %v1353 = vsub.f32 %v946, %v1241
        %v1354 = vsub.f32 %v951, %v1244
        %v1355 = vsub.f32 %v954, %v1247
        %v1356 = vsub.f32 %v959, %v1250
        %v1357 = vsub.f32 %v962, %v1253
        %v1358 = vsub.f32 %v967, %v1256
        %v1359 = vsub.f32 %v970, %v1259
        %v1360 = vsub.f32 %v975, %v1262
        %v1361 = vsub.f32 %v978, %v1265
        %v1362 = vsub.f32 %v1059, %v1268
        %v1363 = vsub.f32 %v1062, %v1271
        %v1364 = vsub.f32 %v1067, %v1274
        %v1365 = vsub.f32 %v1070, %v1277
        %v1366 = vsub.f32 %v1075, %v1280
        %v1367 = vsub.f32 %v1078, %v1283
        %v1368 = vsub.f32 %v1083, %v1286
        %v1369 = vsub.f32 %v1086, %v1289
        %v1370 = vsub.f32 %v1091, %v1292
        %v1371 = vsub.f32 %v1094, %v1295
        %v1372 = vsub.f32 %v1099, %v1298
        %v1373 = vsub.f32 %v1102, %v1301
        %v1374 = vsub.f32 %v1107, %v1304
        %v1375 = vsub.f32 %v1110, %v1307
        %v1376 = vsub.f32 %v1115, %v1310
        %v1377 = vsub.f32 %v1118, %v1313
        %v1378 = vmul.f32 %v1314, 1.442695
        %v1379 = vpow.pop %v1378
        %v1380 = vmul.f32 %v1315, 1.442695
        %v1381 = vpow.pop %v1380
        %v1382 = vmul.f32 %v1316, 1.442695
        %v1383 = vpow.pop %v1382
        %v1384 = vmul.f32 %v1317, 1.442695
        %v1385 = vpow.pop %v1384
        %v1386 = vmul.f32 %v1318, 1.442695
        %v1387 = vpow.pop %v1386
        %v1388 = vmul.f32 %v1319, 1.442695
        %v1389 = vpow.pop %v1388
        %v1390 = vmul.f32 %v1320, 1.442695
        %v1391 = vpow.pop %v1390
        %v1392 = vmul.f32 %v1321, 1.442695
        %v1393 = vpow.pop %v1392
        %v1394 = vmul.f32 %v1322, 1.442695
        %v1395 = vpow.pop %v1394
        %v1396 = vmul.f32 %v1323, 1.442695
        %v1397 = vpow.pop %v1396
        %v1398 = vmul.f32 %v1324, 1.442695
        %v1399 = vpow.pop %v1398
        %v1400 = vmul.f32 %v1325, 1.442695
        %v1401 = vpow.pop %v1400
        %v1402 = vmul.f32 %v1326, 1.442695
        %v1403 = vpow.pop %v1402
        %v1404 = vmul.f32 %v1327, 1.442695
        %v1405 = vpow.pop %v1404
        %v1406 = vmul.f32 %v1328, 1.442695
        %v1407 = vpow.pop %v1406
        %v1408 = vmul.f32 %v1329, 1.442695
        %v1409 = vpow.pop %v1408
        %v1410 = vmul.f32 %v1330, 1.442695
        %v1411 = vpow.pop %v1410
        %v1412 = vmul.f32 %v1331, 1.442695
        %v1413 = vpow.pop %v1412
        %v1414 = vmul.f32 %v1332, 1.442695
        %v1415 = vpow.pop %v1414
        %v1416 = vmul.f32 %v1333, 1.442695
        %v1417 = vpow.pop %v1416
        %v1418 = vmul.f32 %v1334, 1.442695
        %v1419 = vpow.pop %v1418
        %v1420 = vmul.f32 %v1335, 1.442695
        %v1421 = vpow.pop %v1420
        %v1422 = vmul.f32 %v1336, 1.442695
        %v1423 = vpow.pop %v1422
        %v1424 = vmul.f32 %v1337, 1.442695
        %v1425 = vpow.pop %v1424
        %v1426 = vmul.f32 %v1338, 1.442695
        %v1427 = vpow.pop %v1426
        %v1428 = vmul.f32 %v1339, 1.442695
        %v1429 = vpow.pop %v1428
        %v1430 = vmul.f32 %v1340, 1.442695
        %v1431 = vpow.pop %v1430
        %v1432 = vmul.f32 %v1341, 1.442695
        %v1433 = vpow.pop %v1432
        %v1434 = vmul.f32 %v1342, 1.442695
        %v1435 = vpow.pop %v1434
        %v1436 = vmul.f32 %v1343, 1.442695
        %v1437 = vpow.pop %v1436
        %v1438 = vmul.f32 %v1344, 1.442695
        %v1439 = vpow.pop %v1438
        %v1440 = vmul.f32 %v1345, 1.442695
        %v1441 = vpow.pop %v1440
        %v1442 = vmul.f32 %v1346, 1.442695
        %v1443 = vpow.pop %v1442
        %v1444 = vmul.f32 %v1347, 1.442695
        %v1445 = vpow.pop %v1444
        %v1446 = vmul.f32 %v1348, 1.442695
        %v1447 = vpow.pop %v1446
        %v1448 = vmul.f32 %v1349, 1.442695
        %v1449 = vpow.pop %v1448
        %v1450 = vmul.f32 %v1350, 1.442695
        %v1451 = vpow.pop %v1450
        %v1452 = vmul.f32 %v1351, 1.442695
        %v1453 = vpow.pop %v1452
        %v1454 = vmul.f32 %v1352, 1.442695
        %v1455 = vpow.pop %v1454
        %v1456 = vmul.f32 %v1353, 1.442695
        %v1457 = vpow.pop %v1456
        %v1458 = vmul.f32 %v1354, 1.442695
        %v1459 = vpow.pop %v1458
        %v1460 = vmul.f32 %v1355, 1.442695
        %v1461 = vpow.pop %v1460
        %v1462 = vmul.f32 %v1356, 1.442695
        %v1463 = vpow.pop %v1462
        %v1464 = vmul.f32 %v1357, 1.442695
        %v1465 = vpow.pop %v1464
        %v1466 = vmul.f32 %v1358, 1.442695
        %v1467 = vpow.pop %v1466
        %v1468 = vmul.f32 %v1359, 1.442695
        %v1469 = vpow.pop %v1468
        %v1470 = vmul.f32 %v1360, 1.442695
        %v1471 = vpow.pop %v1470
        %v1472 = vmul.f32 %v1361, 1.442695
        %v1473 = vpow.pop %v1472
        %v1474 = vmul.f32 %v1362, 1.442695
        %v1475 = vpow.pop %v1474
        %v1476 = vmul.f32 %v1363, 1.442695
        %v1477 = vpow.pop %v1476
        %v1478 = vmul.f32 %v1364, 1.442695
        %v1479 = vpow.pop %v1478
        %v1480 = vmul.f32 %v1365, 1.442695
        %v1481 = vpow.pop %v1480
        %v1482 = vmul.f32 %v1366, 1.442695
        %v1483 = vpow.pop %v1482
        %v1484 = vmul.f32 %v1367, 1.442695
        %v1485 = vpow.pop %v1484
        %v1486 = vmul.f32 %v1368, 1.442695
        %v1487 = vpow.pop %v1486
        %v1488 = vmul.f32 %v1369, 1.442695
        %v1489 = vpow.pop %v1488
        %v1490 = vmul.f32 %v1370, 1.442695
        %v1491 = vpow.pop %v1490
        %v1492 = vmul.f32 %v1371, 1.442695
        %v1493 = vpow.pop %v1492
        %v1494 = vmul.f32 %v1372, 1.442695
        %v1495 = vpow.pop %v1494
        %v1496 = vmul.f32 %v1373, 1.442695
        %v1497 = vpow.pop %v1496
        %v1498 = vmul.f32 %v1374, 1.442695
        %v1499 = vpow.pop %v1498
        %v1500 = vmul.f32 %v1375, 1.442695
        %v1501 = vpow.pop %v1500
        %v1502 = vmul.f32 %v1376, 1.442695
        %v1503 = vpow.pop %v1502
        %v1504 = vmul.f32 %v1377, 1.442695
        %v1505 = vpow.pop %v1504
        %v1506 = vsel %vm1121, %v1379, 0.0
        %1507 = vadd.xlane.f32.xlu0 %v1506
        %v1508 = vpop.xlane.xlu0 %1507
        %v1509 = vsel %vm1121, %v1381, 0.0
        %1510 = vadd.xlane.f32.xlu0 %v1509
        %v1511 = vpop.xlane.xlu0 %1510
        %v1512 = vsel %vm1121, %v1383, 0.0
        %1513 = vadd.xlane.f32.xlu0 %v1512
        %v1514 = vpop.xlane.xlu0 %1513
        %v1515 = vsel %vm1121, %v1385, 0.0
        %1516 = vadd.xlane.f32.xlu0 %v1515
        %v1517 = vpop.xlane.xlu0 %1516
        %v1518 = vsel %vm1121, %v1387, 0.0
        %1519 = vadd.xlane.f32.xlu0 %v1518
        %v1520 = vpop.xlane.xlu0 %1519
        %v1521 = vsel %vm1121, %v1389, 0.0
        %1522 = vadd.xlane.f32.xlu0 %v1521
        %v1523 = vpop.xlane.xlu0 %1522
        %v1524 = vsel %vm1121, %v1391, 0.0
        %1525 = vadd.xlane.f32.xlu0 %v1524
        %v1526 = vpop.xlane.xlu0 %1525
        %v1527 = vsel %vm1121, %v1393, 0.0
        %1528 = vadd.xlane.f32.xlu0 %v1527
        %v1529 = vpop.xlane.xlu0 %1528
        %v1530 = vsel %vm1121, %v1395, 0.0
        %1531 = vadd.xlane.f32.xlu0 %v1530
        %v1532 = vpop.xlane.xlu0 %1531
        %v1533 = vsel %vm1121, %v1397, 0.0
        %1534 = vadd.xlane.f32.xlu0 %v1533
        %v1535 = vpop.xlane.xlu0 %1534
        %v1536 = vsel %vm1121, %v1399, 0.0
        %1537 = vadd.xlane.f32.xlu0 %v1536
        %v1538 = vpop.xlane.xlu0 %1537
        %v1539 = vsel %vm1121, %v1401, 0.0
        %1540 = vadd.xlane.f32.xlu0 %v1539
        %v1541 = vpop.xlane.xlu0 %1540
        %v1542 = vsel %vm1121, %v1403, 0.0
        %1543 = vadd.xlane.f32.xlu0 %v1542
        %v1544 = vpop.xlane.xlu0 %1543
        %v1545 = vsel %vm1121, %v1405, 0.0
        %1546 = vadd.xlane.f32.xlu0 %v1545
        %v1547 = vpop.xlane.xlu0 %1546
        %v1548 = vsel %vm1121, %v1407, 0.0
        %1549 = vadd.xlane.f32.xlu0 %v1548
        %v1550 = vpop.xlane.xlu0 %1549
        %v1551 = vsel %vm1121, %v1409, 0.0
        %1552 = vadd.xlane.f32.xlu0 %v1551
        %v1553 = vpop.xlane.xlu0 %1552
        %v1554 = vsel %vm1121, %v1411, 0.0
        %1555 = vadd.xlane.f32.xlu0 %v1554
        %v1556 = vpop.xlane.xlu0 %1555
        %v1557 = vsel %vm1121, %v1413, 0.0
        %1558 = vadd.xlane.f32.xlu0 %v1557
        %v1559 = vpop.xlane.xlu0 %1558
        %v1560 = vsel %vm1121, %v1415, 0.0
        %1561 = vadd.xlane.f32.xlu0 %v1560
        %v1562 = vpop.xlane.xlu0 %1561
        %v1563 = vsel %vm1121, %v1417, 0.0
        %1564 = vadd.xlane.f32.xlu0 %v1563
        %v1565 = vpop.xlane.xlu0 %1564
        %v1566 = vsel %vm1121, %v1419, 0.0
        %1567 = vadd.xlane.f32.xlu0 %v1566
        %v1568 = vpop.xlane.xlu0 %1567
        %v1569 = vsel %vm1121, %v1421, 0.0
        %1570 = vadd.xlane.f32.xlu0 %v1569
        %v1571 = vpop.xlane.xlu0 %1570
        %v1572 = vsel %vm1121, %v1423, 0.0
        %1573 = vadd.xlane.f32.xlu0 %v1572
        %v1574 = vpop.xlane.xlu0 %1573
        %v1575 = vsel %vm1121, %v1425, 0.0
        %1576 = vadd.xlane.f32.xlu0 %v1575
        %v1577 = vpop.xlane.xlu0 %1576
        %v1578 = vsel %vm1121, %v1427, 0.0
        %1579 = vadd.xlane.f32.xlu0 %v1578
        %v1580 = vpop.xlane.xlu0 %1579
        %v1581 = vsel %vm1121, %v1429, 0.0
        %1582 = vadd.xlane.f32.xlu0 %v1581
        %v1583 = vpop.xlane.xlu0 %1582
        %v1584 = vsel %vm1121, %v1431, 0.0
        %1585 = vadd.xlane.f32.xlu0 %v1584
        %v1586 = vpop.xlane.xlu0 %1585
        %v1587 = vsel %vm1121, %v1433, 0.0
        %1588 = vadd.xlane.f32.xlu0 %v1587
        %v1589 = vpop.xlane.xlu0 %1588
        %v1590 = vsel %vm1121, %v1435, 0.0
        %1591 = vadd.xlane.f32.xlu0 %v1590
        %v1592 = vpop.xlane.xlu0 %1591
        %v1593 = vsel %vm1121, %v1437, 0.0
        %1594 = vadd.xlane.f32.xlu0 %v1593
        %v1595 = vpop.xlane.xlu0 %1594
        %v1596 = vsel %vm1121, %v1439, 0.0
        %1597 = vadd.xlane.f32.xlu0 %v1596
        %v1598 = vpop.xlane.xlu0 %1597
        %v1599 = vsel %vm1121, %v1441, 0.0
        %1600 = vadd.xlane.f32.xlu0 %v1599
        %v1601 = vpop.xlane.xlu0 %1600
        %v1602 = vsel %vm1121, %v1443, 0.0
        %1603 = vadd.xlane.f32.xlu0 %v1602
        %v1604 = vpop.xlane.xlu0 %1603
        %v1605 = vsel %vm1121, %v1445, 0.0
        %1606 = vadd.xlane.f32.xlu0 %v1605
        %v1607 = vpop.xlane.xlu0 %1606
        %v1608 = vsel %vm1121, %v1447, 0.0
        %1609 = vadd.xlane.f32.xlu0 %v1608
        %v1610 = vpop.xlane.xlu0 %1609
        %v1611 = vsel %vm1121, %v1449, 0.0
        %1612 = vadd.xlane.f32.xlu0 %v1611
        %v1613 = vpop.xlane.xlu0 %1612
        %v1614 = vsel %vm1121, %v1451, 0.0
        %1615 = vadd.xlane.f32.xlu0 %v1614
        %v1616 = vpop.xlane.xlu0 %1615
        %v1617 = vsel %vm1121, %v1453, 0.0
        %1618 = vadd.xlane.f32.xlu0 %v1617
        %v1619 = vpop.xlane.xlu0 %1618
        %v1620 = vsel %vm1121, %v1455, 0.0
        %1621 = vadd.xlane.f32.xlu0 %v1620
        %v1622 = vpop.xlane.xlu0 %1621
        %v1623 = vsel %vm1121, %v1457, 0.0
        %1624 = vadd.xlane.f32.xlu0 %v1623
        %v1625 = vpop.xlane.xlu0 %1624
        %v1626 = vsel %vm1121, %v1459, 0.0
        %1627 = vadd.xlane.f32.xlu0 %v1626
        %v1628 = vpop.xlane.xlu0 %1627
        %v1629 = vsel %vm1121, %v1461, 0.0
        %1630 = vadd.xlane.f32.xlu0 %v1629
        %v1631 = vpop.xlane.xlu0 %1630
        %v1632 = vsel %vm1121, %v1463, 0.0
        %1633 = vadd.xlane.f32.xlu0 %v1632
        %v1634 = vpop.xlane.xlu0 %1633
        %v1635 = vsel %vm1121, %v1465, 0.0
        %1636 = vadd.xlane.f32.xlu0 %v1635
        %v1637 = vpop.xlane.xlu0 %1636
        %v1638 = vsel %vm1121, %v1467, 0.0
        %1639 = vadd.xlane.f32.xlu0 %v1638
        %v1640 = vpop.xlane.xlu0 %1639
        %v1641 = vsel %vm1121, %v1469, 0.0
        %1642 = vadd.xlane.f32.xlu0 %v1641
        %v1643 = vpop.xlane.xlu0 %1642
        %v1644 = vsel %vm1121, %v1471, 0.0
        %1645 = vadd.xlane.f32.xlu0 %v1644
        %v1646 = vpop.xlane.xlu0 %1645
        %v1647 = vsel %vm1121, %v1473, 0.0
        %1648 = vadd.xlane.f32.xlu0 %v1647
        %v1649 = vpop.xlane.xlu0 %1648
        %v1650 = vsel %vm1121, %v1475, 0.0
        %1651 = vadd.xlane.f32.xlu0 %v1650
        %v1652 = vpop.xlane.xlu0 %1651
        %v1653 = vsel %vm1121, %v1477, 0.0
        %1654 = vadd.xlane.f32.xlu0 %v1653
        %v1655 = vpop.xlane.xlu0 %1654
        %v1656 = vsel %vm1121, %v1479, 0.0
        %1657 = vadd.xlane.f32.xlu0 %v1656
        %v1658 = vpop.xlane.xlu0 %1657
        %v1659 = vsel %vm1121, %v1481, 0.0
        %1660 = vadd.xlane.f32.xlu0 %v1659
        %v1661 = vpop.xlane.xlu0 %1660
        %v1662 = vsel %vm1121, %v1483, 0.0
        %1663 = vadd.xlane.f32.xlu0 %v1662
        %v1664 = vpop.xlane.xlu0 %1663
        %v1665 = vsel %vm1121, %v1485, 0.0
        %1666 = vadd.xlane.f32.xlu0 %v1665
        %v1667 = vpop.xlane.xlu0 %1666
        %v1668 = vsel %vm1121, %v1487, 0.0
        %1669 = vadd.xlane.f32.xlu0 %v1668
        %v1670 = vpop.xlane.xlu0 %1669
        %v1671 = vsel %vm1121, %v1489, 0.0
        %1672 = vadd.xlane.f32.xlu0 %v1671
        %v1673 = vpop.xlane.xlu0 %1672
        %v1674 = vsel %vm1121, %v1491, 0.0
        %1675 = vadd.xlane.f32.xlu0 %v1674
        %v1676 = vpop.xlane.xlu0 %1675
        %v1677 = vsel %vm1121, %v1493, 0.0
        %1678 = vadd.xlane.f32.xlu0 %v1677
        %v1679 = vpop.xlane.xlu0 %1678
        %v1680 = vsel %vm1121, %v1495, 0.0
        %1681 = vadd.xlane.f32.xlu0 %v1680
        %v1682 = vpop.xlane.xlu0 %1681
        %v1683 = vsel %vm1121, %v1497, 0.0
        %1684 = vadd.xlane.f32.xlu0 %v1683
        %v1685 = vpop.xlane.xlu0 %1684
        %v1686 = vsel %vm1121, %v1499, 0.0
        %1687 = vadd.xlane.f32.xlu0 %v1686
        %v1688 = vpop.xlane.xlu0 %1687
        %v1689 = vsel %vm1121, %v1501, 0.0
        %1690 = vadd.xlane.f32.xlu0 %v1689
        %v1691 = vpop.xlane.xlu0 %1690
        %v1692 = vsel %vm1121, %v1503, 0.0
        %1693 = vadd.xlane.f32.xlu0 %v1692
        %v1694 = vpop.xlane.xlu0 %1693
        %v1695 = vsel %vm1121, %v1505, 0.0
        %1696 = vadd.xlane.f32.xlu0 %v1695
        %v1697 = vpop.xlane.xlu0 %1696
        %v1698 = vpack.c.bf16 %v1381, %v1379
        %v1699 = vpack.c.bf16 %v1385, %v1383
        %v1700 = vpack.c.bf16 %v1389, %v1387
        %v1701 = vpack.c.bf16 %v1393, %v1391
        %v1702 = vpack.c.bf16 %v1397, %v1395
        %v1703 = vpack.c.bf16 %v1401, %v1399
        %v1704 = vpack.c.bf16 %v1405, %v1403
        %v1705 = vpack.c.bf16 %v1409, %v1407
        %v1706 = vpack.c.bf16 %v1413, %v1411
        %v1707 = vpack.c.bf16 %v1417, %v1415
        %v1708 = vpack.c.bf16 %v1421, %v1419
        %v1709 = vpack.c.bf16 %v1425, %v1423
        %v1710 = vpack.c.bf16 %v1429, %v1427
        %v1711 = vpack.c.bf16 %v1433, %v1431
        %v1712 = vpack.c.bf16 %v1437, %v1435
        %v1713 = vpack.c.bf16 %v1441, %v1439
        %v1714 = vpack.c.bf16 %v1445, %v1443
        %v1715 = vpack.c.bf16 %v1449, %v1447
        %v1716 = vpack.c.bf16 %v1453, %v1451
        %v1717 = vpack.c.bf16 %v1457, %v1455
        %v1718 = vpack.c.bf16 %v1461, %v1459
        %v1719 = vpack.c.bf16 %v1465, %v1463
        %v1720 = vpack.c.bf16 %v1469, %v1467
        %v1721 = vpack.c.bf16 %v1473, %v1471
        %v1722 = vpack.c.bf16 %v1477, %v1475
        %v1723 = vpack.c.bf16 %v1481, %v1479
        %v1724 = vpack.c.bf16 %v1485, %v1483
        %v1725 = vpack.c.bf16 %v1489, %v1487
        %v1726 = vpack.c.bf16 %v1493, %v1491
        %v1727 = vpack.c.bf16 %v1497, %v1495
        %v1728 = vpack.c.bf16 %v1501, %v1499
        %v1729 = vpack.c.bf16 %v1505, %v1503
        %v1731 = vsel %vm1121, %v555, 0
        %v1734 = vsel %vm1121, %v1698, 0
        %v1737 = vsel %vm1121, %v1699, 0
        %v1740 = vsel %vm1121, %v1700, 0
        %v1743 = vsel %vm1121, %v1701, 0
        %v1746 = vsel %vm1121, %v1702, 0
        %v1749 = vsel %vm1121, %v1703, 0
        %v1752 = vsel %vm1121, %v1704, 0
        %v1755 = vsel %vm1121, %v1705, 0
        %1757 = vmatprep.subr.bf16.mxu0 0
        %1758 = vmatpush1.bf16.xpose.msra.mxu0 %v1734
        %1759 = vmatprep.subr.bf16.mxu0 0
        %1760 = vmatpush1.bf16.xpose.msra.mxu0 %v1737
        %1761 = vmatprep.subr.bf16.mxu0 0
        %1762 = vmatpush1.bf16.xpose.msra.mxu0 %v1740
        %1763 = vmatprep.subr.bf16.mxu0 0
        %1764 = vmatpush1.bf16.xpose.msra.mxu0 %v1743
        %1765 = vmatprep.subr.bf16.mxu0 0
        %1766 = vmatpush1.bf16.xpose.msra.mxu0 %v1746
        %1767 = vmatprep.subr.bf16.mxu0 0
        %1768 = vmatpush1.bf16.xpose.msra.mxu0 %v1749
        %1769 = vmatprep.subr.bf16.mxu0 0
        %1770 = vmatpush1.bf16.xpose.msra.mxu0 %v1752
        %1771 = vmatprep.subr.bf16.mxu0 0
        %1772 = vmatpush1.bf16.xpose.msra.mxu0 %v1755
        %1773 = vmatprep.subr.bf16.mxu0 0
        %1774 = vmatpush1.bf16.xpose.msra.mxu0 0
        %1775 = vmatprep.subr.bf16.mxu0 0
        %1776 = vmatpush1.bf16.xpose.msra.mxu0 0
        %1777 = vmatprep.subr.bf16.mxu0 0
        %1778 = vmatpush1.bf16.xpose.msra.mxu0 0
        %1779 = vmatprep.subr.bf16.mxu0 0
        %1780 = vmatpush1.bf16.xpose.msra.mxu0 0
        %1781 = vmatprep.subr.bf16.mxu0 0
        %1782 = vmatpush1.bf16.xpose.msra.mxu0 0
        %1783 = vmatprep.subr.bf16.mxu0 0
        %1784 = vmatpush1.bf16.xpose.msra.mxu0 0
        %1785 = vmatprep.subr.bf16.mxu0 0
        %1786 = vmatpush1.bf16.xpose.msra.mxu0 0
        %1787 = vmatprep.subr.bf16.mxu0 0
        %1788 = vmatpush1.bf16.xpose.msra.mxu0 0
        %1789 = vmatprep.mubr.bf16.mxu0 0
        %1790 = vmatmul.mubr.bf16.gmra.mrb[0].mxu0 %v1731
        %v1791 = vpop.f32.mrb[0].mxu0
        %v1792 = vadd.f32 0.0, %v1791
        %v1793 = vpop.f32.mrb[0].mxu0
        %v1794 = vpop.f32.mrb[0].mxu0
        %v1795 = vpop.f32.mrb[0].mxu0
        %1796 = vdwg.mxu0
        %v1798 = vsel %vm1121, %v556, 0
        %v1801 = vsel %vm1121, %v1706, 0
        %v1804 = vsel %vm1121, %v1707, 0
        %v1807 = vsel %vm1121, %v1708, 0
        %v1810 = vsel %vm1121, %v1709, 0
        %v1813 = vsel %vm1121, %v1710, 0
        %v1816 = vsel %vm1121, %v1711, 0
        %v1819 = vsel %vm1121, %v1712, 0
        %v1822 = vsel %vm1121, %v1713, 0
        %1824 = vmatprep.subr.bf16.mxu0 0
        %1825 = vmatpush1.bf16.xpose.msra.mxu0 %v1801
        %1826 = vmatprep.subr.bf16.mxu0 0
        %1827 = vmatpush1.bf16.xpose.msra.mxu0 %v1804
        %1828 = vmatprep.subr.bf16.mxu0 0
        %1829 = vmatpush1.bf16.xpose.msra.mxu0 %v1807
        %1830 = vmatprep.subr.bf16.mxu0 0
        %1831 = vmatpush1.bf16.xpose.msra.mxu0 %v1810
        %1832 = vmatprep.subr.bf16.mxu0 0
        %1833 = vmatpush1.bf16.xpose.msra.mxu0 %v1813
        %1834 = vmatprep.subr.bf16.mxu0 0
        %1835 = vmatpush1.bf16.xpose.msra.mxu0 %v1816
        %1836 = vmatprep.subr.bf16.mxu0 0
        %1837 = vmatpush1.bf16.xpose.msra.mxu0 %v1819
        %1838 = vmatprep.subr.bf16.mxu0 0
        %1839 = vmatpush1.bf16.xpose.msra.mxu0 %v1822
        %1840 = vmatprep.subr.bf16.mxu0 0
        %1841 = vmatpush1.bf16.xpose.msra.mxu0 0
        %1842 = vmatprep.subr.bf16.mxu0 0
        %1843 = vmatpush1.bf16.xpose.msra.mxu0 0
        %1844 = vmatprep.subr.bf16.mxu0 0
        %1845 = vmatpush1.bf16.xpose.msra.mxu0 0
        %1846 = vmatprep.subr.bf16.mxu0 0
        %1847 = vmatpush1.bf16.xpose.msra.mxu0 0
        %1848 = vmatprep.subr.bf16.mxu0 0
        %1849 = vmatpush1.bf16.xpose.msra.mxu0 0
        %1850 = vmatprep.subr.bf16.mxu0 0
        %1851 = vmatpush1.bf16.xpose.msra.mxu0 0
        %1852 = vmatprep.subr.bf16.mxu0 0
        %1853 = vmatpush1.bf16.xpose.msra.mxu0 0
        %1854 = vmatprep.subr.bf16.mxu0 0
        %1855 = vmatpush1.bf16.xpose.msra.mxu0 0
        %1856 = vmatprep.mubr.bf16.mxu0 0
        %1857 = vmatmul.mubr.bf16.gmra.mrb[0].mxu0 %v1798
        %v1858 = vpop.f32.mrb[0].mxu0
        %v1859 = vadd.f32 0.0, %v1858
        %v1860 = vpop.f32.mrb[0].mxu0
        %v1861 = vpop.f32.mrb[0].mxu0
        %v1862 = vpop.f32.mrb[0].mxu0
        %1863 = vdwg.mxu0
        %v1865 = vsel %vm1121, %v557, 0
        %v1868 = vsel %vm1121, %v1714, 0
        %v1871 = vsel %vm1121, %v1715, 0
        %v1874 = vsel %vm1121, %v1716, 0
        %v1877 = vsel %vm1121, %v1717, 0
        %v1880 = vsel %vm1121, %v1718, 0
        %v1883 = vsel %vm1121, %v1719, 0
        %v1886 = vsel %vm1121, %v1720, 0
        %v1889 = vsel %vm1121, %v1721, 0
        %1891 = vmatprep.subr.bf16.mxu0 0
        %1892 = vmatpush1.bf16.xpose.msra.mxu0 %v1868
        %1893 = vmatprep.subr.bf16.mxu0 0
        %1894 = vmatpush1.bf16.xpose.msra.mxu0 %v1871
        %1895 = vmatprep.subr.bf16.mxu0 0
        %1896 = vmatpush1.bf16.xpose.msra.mxu0 %v1874
        %1897 = vmatprep.subr.bf16.mxu0 0
        %1898 = vmatpush1.bf16.xpose.msra.mxu0 %v1877
        %1899 = vmatprep.subr.bf16.mxu0 0
        %1900 = vmatpush1.bf16.xpose.msra.mxu0 %v1880
        %1901 = vmatprep.subr.bf16.mxu0 0
        %1902 = vmatpush1.bf16.xpose.msra.mxu0 %v1883
        %1903 = vmatprep.subr.bf16.mxu0 0
        %1904 = vmatpush1.bf16.xpose.msra.mxu0 %v1886
        %1905 = vmatprep.subr.bf16.mxu0 0
        %1906 = vmatpush1.bf16.xpose.msra.mxu0 %v1889
        %1907 = vmatprep.subr.bf16.mxu0 0
        %1908 = vmatpush1.bf16.xpose.msra.mxu0 0
        %1909 = vmatprep.subr.bf16.mxu0 0
        %1910 = vmatpush1.bf16.xpose.msra.mxu0 0
        %1911 = vmatprep.subr.bf16.mxu0 0
        %1912 = vmatpush1.bf16.xpose.msra.mxu0 0
        %1913 = vmatprep.subr.bf16.mxu0 0
        %1914 = vmatpush1.bf16.xpose.msra.mxu0 0
        %1915 = vmatprep.subr.bf16.mxu0 0
        %1916 = vmatpush1.bf16.xpose.msra.mxu0 0
        %1917 = vmatprep.subr.bf16.mxu0 0
        %1918 = vmatpush1.bf16.xpose.msra.mxu0 0
        %1919 = vmatprep.subr.bf16.mxu0 0
        %1920 = vmatpush1.bf16.xpose.msra.mxu0 0
        %1921 = vmatprep.subr.bf16.mxu0 0
        %1922 = vmatpush1.bf16.xpose.msra.mxu0 0
        %1923 = vmatprep.mubr.bf16.mxu0 0
        %1924 = vmatmul.mubr.bf16.gmra.mrb[0].mxu0 %v1865
        %v1925 = vpop.f32.mrb[0].mxu0
        %v1926 = vadd.f32 0.0, %v1925
        %v1927 = vpop.f32.mrb[0].mxu0
        %v1928 = vpop.f32.mrb[0].mxu0
        %v1929 = vpop.f32.mrb[0].mxu0
        %1930 = vdwg.mxu0
        %v1932 = vsel %vm1121, %v558, 0
        %v1935 = vsel %vm1121, %v1722, 0
        %v1938 = vsel %vm1121, %v1723, 0
        %v1941 = vsel %vm1121, %v1724, 0
        %v1944 = vsel %vm1121, %v1725, 0
        %v1947 = vsel %vm1121, %v1726, 0
        %v1950 = vsel %vm1121, %v1727, 0
        %v1953 = vsel %vm1121, %v1728, 0
        %v1956 = vsel %vm1121, %v1729, 0
        %1958 = vmatprep.subr.bf16.mxu0 0
        %1959 = vmatpush1.bf16.xpose.msra.mxu0 %v1935
        %1960 = vmatprep.subr.bf16.mxu0 0
        %1961 = vmatpush1.bf16.xpose.msra.mxu0 %v1938
        %1962 = vmatprep.subr.bf16.mxu0 0
        %1963 = vmatpush1.bf16.xpose.msra.mxu0 %v1941
        %1964 = vmatprep.subr.bf16.mxu0 0
        %1965 = vmatpush1.bf16.xpose.msra.mxu0 %v1944
        %1966 = vmatprep.subr.bf16.mxu0 0
        %1967 = vmatpush1.bf16.xpose.msra.mxu0 %v1947
        %1968 = vmatprep.subr.bf16.mxu0 0
        %1969 = vmatpush1.bf16.xpose.msra.mxu0 %v1950
        %1970 = vmatprep.subr.bf16.mxu0 0
        %1971 = vmatpush1.bf16.xpose.msra.mxu0 %v1953
        %1972 = vmatprep.subr.bf16.mxu0 0
        %1973 = vmatpush1.bf16.xpose.msra.mxu0 %v1956
        %1974 = vmatprep.subr.bf16.mxu0 0
        %1975 = vmatpush1.bf16.xpose.msra.mxu0 0
        %1976 = vmatprep.subr.bf16.mxu0 0
        %1977 = vmatpush1.bf16.xpose.msra.mxu0 0
        %1978 = vmatprep.subr.bf16.mxu0 0
        %1979 = vmatpush1.bf16.xpose.msra.mxu0 0
        %1980 = vmatprep.subr.bf16.mxu0 0
        %1981 = vmatpush1.bf16.xpose.msra.mxu0 0
        %1982 = vmatprep.subr.bf16.mxu0 0
        %1983 = vmatpush1.bf16.xpose.msra.mxu0 0
        %1984 = vmatprep.subr.bf16.mxu0 0
        %1985 = vmatpush1.bf16.xpose.msra.mxu0 0
        %1986 = vmatprep.subr.bf16.mxu0 0
        %1987 = vmatpush1.bf16.xpose.msra.mxu0 0
        %1988 = vmatprep.subr.bf16.mxu0 0
        %1989 = vmatpush1.bf16.xpose.msra.mxu0 0
        %1990 = vmatprep.mubr.bf16.mxu0 0
        %1991 = vmatmul.mubr.bf16.gmra.mrb[0].mxu0 %v1932
        %v1992 = vpop.f32.mrb[0].mxu0
        %v1993 = vadd.f32 0.0, %v1992
        %v1994 = vpop.f32.mrb[0].mxu0
        %v1995 = vpop.f32.mrb[0].mxu0
        %v1996 = vpop.f32.mrb[0].mxu0
        %1997 = vdwg.mxu0
        %v1998 = vrcp.pop %v1508
        %v1999 = vrcp.pop %v1511
        %v2000 = vrcp.pop %v1514
        %v2001 = vrcp.pop %v1517
        %v2002 = vrcp.pop %v1520
        %v2003 = vrcp.pop %v1523
        %v2004 = vrcp.pop %v1526
        %v2005 = vrcp.pop %v1529
        %v2006 = vrcp.pop %v1532
        %v2007 = vrcp.pop %v1535
        %v2008 = vrcp.pop %v1538
        %v2009 = vrcp.pop %v1541
        %v2010 = vrcp.pop %v1544
        %v2011 = vrcp.pop %v1547
        %v2012 = vrcp.pop %v1550
        %v2013 = vrcp.pop %v1553
        %v2014 = vrcp.pop %v1556
        %v2015 = vrcp.pop %v1559
        %v2016 = vrcp.pop %v1562
        %v2017 = vrcp.pop %v1565
        %v2018 = vrcp.pop %v1568
        %v2019 = vrcp.pop %v1571
        %v2020 = vrcp.pop %v1574
        %v2021 = vrcp.pop %v1577
        %v2022 = vrcp.pop %v1580
        %v2023 = vrcp.pop %v1583
        %v2024 = vrcp.pop %v1586
        %v2025 = vrcp.pop %v1589
        %v2026 = vrcp.pop %v1592
        %v2027 = vrcp.pop %v1595
        %v2028 = vrcp.pop %v1598
        %v2029 = vrcp.pop %v1601
        %v2030 = vrcp.pop %v1604
        %v2031 = vrcp.pop %v1607
        %v2032 = vrcp.pop %v1610
        %v2033 = vrcp.pop %v1613
        %v2034 = vrcp.pop %v1616
        %v2035 = vrcp.pop %v1619
        %v2036 = vrcp.pop %v1622
        %v2037 = vrcp.pop %v1625
        %v2038 = vrcp.pop %v1628
        %v2039 = vrcp.pop %v1631
        %v2040 = vrcp.pop %v1634
        %v2041 = vrcp.pop %v1637
        %v2042 = vrcp.pop %v1640
        %v2043 = vrcp.pop %v1643
        %v2044 = vrcp.pop %v1646
        %v2045 = vrcp.pop %v1649
        %v2046 = vrcp.pop %v1652
        %v2047 = vrcp.pop %v1655
        %v2048 = vrcp.pop %v1658
        %v2049 = vrcp.pop %v1661
        %v2050 = vrcp.pop %v1664
        %v2051 = vrcp.pop %v1667
        %v2052 = vrcp.pop %v1670
        %v2053 = vrcp.pop %v1673
        %v2054 = vrcp.pop %v1676
        %v2055 = vrcp.pop %v1679
        %v2056 = vrcp.pop %v1682
        %v2057 = vrcp.pop %v1685
        %v2058 = vrcp.pop %v1688
        %v2059 = vrcp.pop %v1691
        %v2060 = vrcp.pop %v1694
        %v2061 = vrcp.pop %v1697
        %v2126 = vlaneseq
        %v2127 = vand.u32 %v2126, 127
        %v2128 = vlaneseq
        %v2129 = vshrl.u32 %v2128, 7
        %v2130 = vsub.s32 %v2127, %v2129
        %v2131 = vrot.slane %v1998, %v2130
        %v2132 = vadd.s32 %v2127, 4294967288
        %v2133 = vlaneseq
        %v2134 = vshrl.u32 %v2133, 7
        %v2135 = vsub.s32 %v2132, %v2134
        %v2136 = vrot.slane %v1999, %v2135
        %vm2137 = vcmask 130112
        %v2138 = vsel %vm2137, %v2136, %v2131
        %v2139 = vadd.s32 %v2127, 4294967280
        %v2140 = vlaneseq
        %v2141 = vshrl.u32 %v2140, 7
        %v2142 = vsub.s32 %v2139, %v2141
        %v2143 = vrot.slane %v2000, %v2142
        %vm2144 = vcmask 195712
        %v2145 = vsel %vm2144, %v2143, %v2138
        %v2146 = vadd.s32 %v2127, 4294967272
        %v2147 = vlaneseq
        %v2148 = vshrl.u32 %v2147, 7
        %v2149 = vsub.s32 %v2146, %v2148
        %v2150 = vrot.slane %v2001, %v2149
        %vm2151 = vcmask 261312
        %v2152 = vsel %vm2151, %v2150, %v2145
        %v2153 = vadd.s32 %v2127, 4294967264
        %v2154 = vlaneseq
        %v2155 = vshrl.u32 %v2154, 7
        %v2156 = vsub.s32 %v2153, %v2155
        %v2157 = vrot.slane %v2002, %v2156
        %vm2158 = vcmask 326912
        %v2159 = vsel %vm2158, %v2157, %v2152
        %v2160 = vadd.s32 %v2127, 4294967256
        %v2161 = vlaneseq
        %v2162 = vshrl.u32 %v2161, 7
        %v2163 = vsub.s32 %v2160, %v2162
        %v2164 = vrot.slane %v2003, %v2163
        %vm2165 = vcmask 392512
        %v2166 = vsel %vm2165, %v2164, %v2159
        %v2167 = vadd.s32 %v2127, 4294967248
        %v2168 = vlaneseq
        %v2169 = vshrl.u32 %v2168, 7
        %v2170 = vsub.s32 %v2167, %v2169
        %v2171 = vrot.slane %v2004, %v2170
        %vm2172 = vcmask 458112
        %v2173 = vsel %vm2172, %v2171, %v2166
        %v2174 = vadd.s32 %v2127, 4294967240
        %v2175 = vlaneseq
        %v2176 = vshrl.u32 %v2175, 7
        %v2177 = vsub.s32 %v2174, %v2176
        %v2178 = vrot.slane %v2005, %v2177
        %vm2179 = vcmask 523712
        %v2180 = vsel %vm2179, %v2178, %v2173
        %v2181 = vadd.s32 %v2127, 4294967232
        %v2182 = vlaneseq
        %v2183 = vshrl.u32 %v2182, 7
        %v2184 = vsub.s32 %v2181, %v2183
        %v2185 = vrot.slane %v2006, %v2184
        %vm2186 = vcmask 589312
        %v2187 = vsel %vm2186, %v2185, %v2180
        %v2188 = vadd.s32 %v2127, 4294967224
        %v2189 = vlaneseq
        %v2190 = vshrl.u32 %v2189, 7
        %v2191 = vsub.s32 %v2188, %v2190
        %v2192 = vrot.slane %v2007, %v2191
        %vm2193 = vcmask 654912
        %v2194 = vsel %vm2193, %v2192, %v2187
        %v2195 = vadd.s32 %v2127, 4294967216
        %v2196 = vlaneseq
        %v2197 = vshrl.u32 %v2196, 7
        %v2198 = vsub.s32 %v2195, %v2197
        %v2199 = vrot.slane %v2008, %v2198
        %vm2200 = vcmask 720512
        %v2201 = vsel %vm2200, %v2199, %v2194
        %v2202 = vadd.s32 %v2127, 4294967208
        %v2203 = vlaneseq
        %v2204 = vshrl.u32 %v2203, 7
        %v2205 = vsub.s32 %v2202, %v2204
        %v2206 = vrot.slane %v2009, %v2205
        %vm2207 = vcmask 786112
        %v2208 = vsel %vm2207, %v2206, %v2201
        %v2209 = vadd.s32 %v2127, 4294967200
        %v2210 = vlaneseq
        %v2211 = vshrl.u32 %v2210, 7
        %v2212 = vsub.s32 %v2209, %v2211
        %v2213 = vrot.slane %v2010, %v2212
        %vm2214 = vcmask 851712
        %v2215 = vsel %vm2214, %v2213, %v2208
        %v2216 = vadd.s32 %v2127, 4294967192
        %v2217 = vlaneseq
        %v2218 = vshrl.u32 %v2217, 7
        %v2219 = vsub.s32 %v2216, %v2218
        %v2220 = vrot.slane %v2011, %v2219
        %vm2221 = vcmask 917312
        %v2222 = vsel %vm2221, %v2220, %v2215
        %v2223 = vadd.s32 %v2127, 4294967184
        %v2224 = vlaneseq
        %v2225 = vshrl.u32 %v2224, 7
        %v2226 = vsub.s32 %v2223, %v2225
        %v2227 = vrot.slane %v2012, %v2226
        %vm2228 = vcmask 982912
        %v2229 = vsel %vm2228, %v2227, %v2222
        %v2230 = vadd.s32 %v2127, 4294967176
        %v2231 = vlaneseq
        %v2232 = vshrl.u32 %v2231, 7
        %v2233 = vsub.s32 %v2230, %v2232
        %v2234 = vrot.slane %v2013, %v2233
        %vm2235 = vcmask 1048512
        %v2236 = vsel %vm2235, %v2234, %v2229
        %v2237 = vlaneseq
        %v2238 = vshrl.u32 %v2237, 7
        %v2239 = vsub.s32 %v2127, %v2238
        %v2240 = vrot.slane %v2014, %v2239
        %v2241 = vlaneseq
        %v2242 = vshrl.u32 %v2241, 7
        %v2243 = vsub.s32 %v2132, %v2242
        %v2244 = vrot.slane %v2015, %v2243
        %v2245 = vsel %vm2137, %v2244, %v2240
        %v2246 = vlaneseq
        %v2247 = vshrl.u32 %v2246, 7
        %v2248 = vsub.s32 %v2139, %v2247
        %v2249 = vrot.slane %v2016, %v2248
        %v2250 = vsel %vm2144, %v2249, %v2245
        %v2251 = vlaneseq
        %v2252 = vshrl.u32 %v2251, 7
        %v2253 = vsub.s32 %v2146, %v2252
        %v2254 = vrot.slane %v2017, %v2253
        %v2255 = vsel %vm2151, %v2254, %v2250
        %v2256 = vlaneseq
        %v2257 = vshrl.u32 %v2256, 7
        %v2258 = vsub.s32 %v2153, %v2257
        %v2259 = vrot.slane %v2018, %v2258
        %v2260 = vsel %vm2158, %v2259, %v2255
        %v2261 = vlaneseq
        %v2262 = vshrl.u32 %v2261, 7
        %v2263 = vsub.s32 %v2160, %v2262
        %v2264 = vrot.slane %v2019, %v2263
        %v2265 = vsel %vm2165, %v2264, %v2260
        %v2266 = vlaneseq
        %v2267 = vshrl.u32 %v2266, 7
        %v2268 = vsub.s32 %v2167, %v2267
        %v2269 = vrot.slane %v2020, %v2268
        %v2270 = vsel %vm2172, %v2269, %v2265
        %v2271 = vlaneseq
        %v2272 = vshrl.u32 %v2271, 7
        %v2273 = vsub.s32 %v2174, %v2272
        %v2274 = vrot.slane %v2021, %v2273
        %v2275 = vsel %vm2179, %v2274, %v2270
        %v2276 = vlaneseq
        %v2277 = vshrl.u32 %v2276, 7
        %v2278 = vsub.s32 %v2181, %v2277
        %v2279 = vrot.slane %v2022, %v2278
        %v2280 = vsel %vm2186, %v2279, %v2275
        %v2281 = vlaneseq
        %v2282 = vshrl.u32 %v2281, 7
        %v2283 = vsub.s32 %v2188, %v2282
        %v2284 = vrot.slane %v2023, %v2283
        %v2285 = vsel %vm2193, %v2284, %v2280
        %v2286 = vlaneseq
        %v2287 = vshrl.u32 %v2286, 7
        %v2288 = vsub.s32 %v2195, %v2287
        %v2289 = vrot.slane %v2024, %v2288
        %v2290 = vsel %vm2200, %v2289, %v2285
        %v2291 = vlaneseq
        %v2292 = vshrl.u32 %v2291, 7
        %v2293 = vsub.s32 %v2202, %v2292
        %v2294 = vrot.slane %v2025, %v2293
        %v2295 = vsel %vm2207, %v2294, %v2290
        %v2296 = vlaneseq
        %v2297 = vshrl.u32 %v2296, 7
        %v2298 = vsub.s32 %v2209, %v2297
        %v2299 = vrot.slane %v2026, %v2298
        %v2300 = vsel %vm2214, %v2299, %v2295
        %v2301 = vlaneseq
        %v2302 = vshrl.u32 %v2301, 7
        %v2303 = vsub.s32 %v2216, %v2302
        %v2304 = vrot.slane %v2027, %v2303
        %v2305 = vsel %vm2221, %v2304, %v2300
        %v2306 = vlaneseq
        %v2307 = vshrl.u32 %v2306, 7
        %v2308 = vsub.s32 %v2223, %v2307
        %v2309 = vrot.slane %v2028, %v2308
        %v2310 = vsel %vm2228, %v2309, %v2305
        %v2311 = vlaneseq
        %v2312 = vshrl.u32 %v2311, 7
        %v2313 = vsub.s32 %v2230, %v2312
        %v2314 = vrot.slane %v2029, %v2313
        %v2315 = vsel %vm2235, %v2314, %v2310
        %v2316 = vlaneseq
        %v2317 = vshrl.u32 %v2316, 7
        %v2318 = vsub.s32 %v2127, %v2317
        %v2319 = vrot.slane %v2030, %v2318
        %v2320 = vlaneseq
        %v2321 = vshrl.u32 %v2320, 7
        %v2322 = vsub.s32 %v2132, %v2321
        %v2323 = vrot.slane %v2031, %v2322
        %v2324 = vsel %vm2137, %v2323, %v2319
        %v2325 = vlaneseq
        %v2326 = vshrl.u32 %v2325, 7
        %v2327 = vsub.s32 %v2139, %v2326
        %v2328 = vrot.slane %v2032, %v2327
        %v2329 = vsel %vm2144, %v2328, %v2324
        %v2330 = vlaneseq
        %v2331 = vshrl.u32 %v2330, 7
        %v2332 = vsub.s32 %v2146, %v2331
        %v2333 = vrot.slane %v2033, %v2332
        %v2334 = vsel %vm2151, %v2333, %v2329
        %v2335 = vlaneseq
        %v2336 = vshrl.u32 %v2335, 7
        %v2337 = vsub.s32 %v2153, %v2336
        %v2338 = vrot.slane %v2034, %v2337
        %v2339 = vsel %vm2158, %v2338, %v2334
        %v2340 = vlaneseq
        %v2341 = vshrl.u32 %v2340, 7
        %v2342 = vsub.s32 %v2160, %v2341
        %v2343 = vrot.slane %v2035, %v2342
        %v2344 = vsel %vm2165, %v2343, %v2339
        %v2345 = vlaneseq
        %v2346 = vshrl.u32 %v2345, 7
        %v2347 = vsub.s32 %v2167, %v2346
        %v2348 = vrot.slane %v2036, %v2347
        %v2349 = vsel %vm2172, %v2348, %v2344
        %v2350 = vlaneseq
        %v2351 = vshrl.u32 %v2350, 7
        %v2352 = vsub.s32 %v2174, %v2351
        %v2353 = vrot.slane %v2037, %v2352
        %v2354 = vsel %vm2179, %v2353, %v2349
        %v2355 = vlaneseq
        %v2356 = vshrl.u32 %v2355, 7
        %v2357 = vsub.s32 %v2181, %v2356
        %v2358 = vrot.slane %v2038, %v2357
        %v2359 = vsel %vm2186, %v2358, %v2354
        %v2360 = vlaneseq
        %v2361 = vshrl.u32 %v2360, 7
        %v2362 = vsub.s32 %v2188, %v2361
        %v2363 = vrot.slane %v2039, %v2362
        %v2364 = vsel %vm2193, %v2363, %v2359
        %v2365 = vlaneseq
        %v2366 = vshrl.u32 %v2365, 7
        %v2367 = vsub.s32 %v2195, %v2366
        %v2368 = vrot.slane %v2040, %v2367
        %v2369 = vsel %vm2200, %v2368, %v2364
        %v2370 = vlaneseq
        %v2371 = vshrl.u32 %v2370, 7
        %v2372 = vsub.s32 %v2202, %v2371
        %v2373 = vrot.slane %v2041, %v2372
        %v2374 = vsel %vm2207, %v2373, %v2369
        %v2375 = vlaneseq
        %v2376 = vshrl.u32 %v2375, 7
        %v2377 = vsub.s32 %v2209, %v2376
        %v2378 = vrot.slane %v2042, %v2377
        %v2379 = vsel %vm2214, %v2378, %v2374
        %v2380 = vlaneseq
        %v2381 = vshrl.u32 %v2380, 7
        %v2382 = vsub.s32 %v2216, %v2381
        %v2383 = vrot.slane %v2043, %v2382
        %v2384 = vsel %vm2221, %v2383, %v2379
        %v2385 = vlaneseq
        %v2386 = vshrl.u32 %v2385, 7
        %v2387 = vsub.s32 %v2223, %v2386
        %v2388 = vrot.slane %v2044, %v2387
        %v2389 = vsel %vm2228, %v2388, %v2384
        %v2390 = vlaneseq
        %v2391 = vshrl.u32 %v2390, 7
        %v2392 = vsub.s32 %v2230, %v2391
        %v2393 = vrot.slane %v2045, %v2392
        %v2394 = vsel %vm2235, %v2393, %v2389
        %v2395 = vlaneseq
        %v2396 = vshrl.u32 %v2395, 7
        %v2397 = vsub.s32 %v2127, %v2396
        %v2398 = vrot.slane %v2046, %v2397
        %v2399 = vlaneseq
        %v2400 = vshrl.u32 %v2399, 7
        %v2401 = vsub.s32 %v2132, %v2400
        %v2402 = vrot.slane %v2047, %v2401
        %v2403 = vsel %vm2137, %v2402, %v2398
        %v2404 = vlaneseq
        %v2405 = vshrl.u32 %v2404, 7
        %v2406 = vsub.s32 %v2139, %v2405
        %v2407 = vrot.slane %v2048, %v2406
        %v2408 = vsel %vm2144, %v2407, %v2403
        %v2409 = vlaneseq
        %v2410 = vshrl.u32 %v2409, 7
        %v2411 = vsub.s32 %v2146, %v2410
        %v2412 = vrot.slane %v2049, %v2411
        %v2413 = vsel %vm2151, %v2412, %v2408
        %v2414 = vlaneseq
        %v2415 = vshrl.u32 %v2414, 7
        %v2416 = vsub.s32 %v2153, %v2415
        %v2417 = vrot.slane %v2050, %v2416
        %v2418 = vsel %vm2158, %v2417, %v2413
        %v2419 = vlaneseq
        %v2420 = vshrl.u32 %v2419, 7
        %v2421 = vsub.s32 %v2160, %v2420
        %v2422 = vrot.slane %v2051, %v2421
        %v2423 = vsel %vm2165, %v2422, %v2418
        %v2424 = vlaneseq
        %v2425 = vshrl.u32 %v2424, 7
        %v2426 = vsub.s32 %v2167, %v2425
        %v2427 = vrot.slane %v2052, %v2426
        %v2428 = vsel %vm2172, %v2427, %v2423
        %v2429 = vlaneseq
        %v2430 = vshrl.u32 %v2429, 7
        %v2431 = vsub.s32 %v2174, %v2430
        %v2432 = vrot.slane %v2053, %v2431
        %v2433 = vsel %vm2179, %v2432, %v2428
        %v2434 = vlaneseq
        %v2435 = vshrl.u32 %v2434, 7
        %v2436 = vsub.s32 %v2181, %v2435
        %v2437 = vrot.slane %v2054, %v2436
        %v2438 = vsel %vm2186, %v2437, %v2433
        %v2439 = vlaneseq
        %v2440 = vshrl.u32 %v2439, 7
        %v2441 = vsub.s32 %v2188, %v2440
        %v2442 = vrot.slane %v2055, %v2441
        %v2443 = vsel %vm2193, %v2442, %v2438
        %v2444 = vlaneseq
        %v2445 = vshrl.u32 %v2444, 7
        %v2446 = vsub.s32 %v2195, %v2445
        %v2447 = vrot.slane %v2056, %v2446
        %v2448 = vsel %vm2200, %v2447, %v2443
        %v2449 = vlaneseq
        %v2450 = vshrl.u32 %v2449, 7
        %v2451 = vsub.s32 %v2202, %v2450
        %v2452 = vrot.slane %v2057, %v2451
        %v2453 = vsel %vm2207, %v2452, %v2448
        %v2454 = vlaneseq
        %v2455 = vshrl.u32 %v2454, 7
        %v2456 = vsub.s32 %v2209, %v2455
        %v2457 = vrot.slane %v2058, %v2456
        %v2458 = vsel %vm2214, %v2457, %v2453
        %v2459 = vlaneseq
        %v2460 = vshrl.u32 %v2459, 7
        %v2461 = vsub.s32 %v2216, %v2460
        %v2462 = vrot.slane %v2059, %v2461
        %v2463 = vsel %vm2221, %v2462, %v2458
        %v2464 = vlaneseq
        %v2465 = vshrl.u32 %v2464, 7
        %v2466 = vsub.s32 %v2223, %v2465
        %v2467 = vrot.slane %v2060, %v2466
        %v2468 = vsel %vm2228, %v2467, %v2463
        %v2469 = vlaneseq
        %v2470 = vshrl.u32 %v2469, 7
        %v2471 = vsub.s32 %v2230, %v2470
        %v2472 = vrot.slane %v2061, %v2471
        %v2473 = vsel %vm2235, %v2472, %v2468
        %vm2474 = vcmask 1042434
        %v2475 = vsel %vm2474, %v2236, %v2236
        %vm2476 = vcmask 1043459
        %v2477 = vsel %vm2476, %v2236, %v2475
        %vm2478 = vcmask 1044484
        %v2479 = vsel %vm2478, %v2236, %v2477
        %vm2480 = vcmask 1045509
        %v2481 = vsel %vm2480, %v2236, %v2479
        %vm2482 = vcmask 1046534
        %v2483 = vsel %vm2482, %v2236, %v2481
        %vm2484 = vcmask 1047559
        %v2485 = vsel %vm2484, %v2236, %v2483
        %v2486 = vsel %vm2474, %v2315, %v2315
        %v2487 = vsel %vm2476, %v2315, %v2486
        %v2488 = vsel %vm2478, %v2315, %v2487
        %v2489 = vsel %vm2480, %v2315, %v2488
        %v2490 = vsel %vm2482, %v2315, %v2489
        %v2491 = vsel %vm2484, %v2315, %v2490
        %v2492 = vsel %vm2474, %v2394, %v2394
        %v2493 = vsel %vm2476, %v2394, %v2492
        %v2494 = vsel %vm2478, %v2394, %v2493
        %v2495 = vsel %vm2480, %v2394, %v2494
        %v2496 = vsel %vm2482, %v2394, %v2495
        %v2497 = vsel %vm2484, %v2394, %v2496
        %v2498 = vsel %vm2474, %v2473, %v2473
        %v2499 = vsel %vm2476, %v2473, %v2498
        %v2500 = vsel %vm2478, %v2473, %v2499
        %v2501 = vsel %vm2480, %v2473, %v2500
        %v2502 = vsel %vm2482, %v2473, %v2501
        %v2503 = vsel %vm2484, %v2473, %v2502
        %v2508 = vmul.f32 %v1792, %v2485
        %v2509 = vmul.f32 %v1859, %v2491
        %v2510 = vmul.f32 %v1926, %v2497
        %v2511 = vmul.f32 %v1993, %v2503
        %v2512 = vpack.c.bf16 %v2509, %v2508
        %v2513 = vpack.c.bf16 %v2511, %v2510
        %2515 = vset.pattern.permute.xlu0 0
        %2516 = vperm.xlu0 %2515, %v280
        %v2517 = vpop.permute.xlu0 %2516
        %2520 = vset.pattern.permute.xlu0 0
        %2521 = vperm.xlu0 %2520, %v281
        %v2522 = vpop.permute.xlu0 %2521
        %2525 = vset.pattern.permute.xlu0 0
        %2526 = vperm.xlu0 %2525, %v282
        %v2527 = vpop.permute.xlu0 %2526
        %2530 = vset.pattern.permute.xlu0 0
        %2531 = vperm.xlu0 %2530, %v283
        %v2532 = vpop.permute.xlu0 %2531
        %2535 = vset.pattern.permute.xlu0 0
        %2536 = vperm.xlu0 %2535, %v284
        %v2537 = vpop.permute.xlu0 %2536
        %2540 = vset.pattern.permute.xlu0 0
        %2541 = vperm.xlu0 %2540, %v285
        %v2542 = vpop.permute.xlu0 %2541
        %2545 = vset.pattern.permute.xlu0 0
        %2546 = vperm.xlu0 %2545, %v286
        %v2547 = vpop.permute.xlu0 %2546
        %2550 = vset.pattern.permute.xlu0 0
        %2551 = vperm.xlu0 %2550, %v287
        %v2552 = vpop.permute.xlu0 %2551
        %v2562 = vunpack.c.l.b16 %v256
        %v2563 = vunpack.c.l.b16 %v257
        %v2564 = vunpack.c.l.b16 %v258
        %v2565 = vunpack.c.l.b16 %v259
        %v2566 = vunpack.c.l.b16 %v260
        %v2567 = vunpack.c.l.b16 %v261
        %v2568 = vunpack.c.l.b16 %v262
        %v2569 = vunpack.c.l.b16 %v263
        %v2570 = vpack.c.b16 %v2563, %v2562
        %v2571 = vpack.c.b16 %v2565, %v2564
        %v2572 = vpack.c.b16 %v2567, %v2566
        %v2573 = vpack.c.b16 %v2569, %v2568
        %v2575 = vsel %vm1121, %v2570, 0
        %v2578 = vsel %vm1121, %v2571, 0
        %v2581 = vsel %vm1121, %v2572, 0
        %v2584 = vsel %vm1121, %v2573, 0
        %2586 = vmatprep.subr.bf16.mxu0 0
        %2587 = vmatpush1.bf16.msra.mxu0 %v338
        %2588 = vmatprep.subr.bf16.mxu0 0
        %2589 = vmatpush1.bf16.msra.mxu0 %v339
        %2590 = vmatprep.subr.bf16.mxu0 0
        %2591 = vmatpush1.bf16.msra.mxu0 %v2512
        %2592 = vmatprep.subr.bf16.mxu0 0
        %2593 = vmatpush1.bf16.msra.mxu0 %v2513
        %2594 = vmatprep.subr.bf16.mxu0 0
        %2595 = vmatpush1.bf16.msra.mxu0 0
        %2596 = vmatprep.subr.bf16.mxu0 0
        %2597 = vmatpush1.bf16.msra.mxu0 0
        %2598 = vmatprep.subr.bf16.mxu0 0
        %2599 = vmatpush1.bf16.msra.mxu0 0
        %2600 = vmatprep.subr.bf16.mxu0 0
        %2601 = vmatpush1.bf16.msra.mxu0 0
        %2602 = vmatprep.subr.bf16.mxu0 0
        %2603 = vmatpush1.bf16.msra.mxu0 0
        %2604 = vmatprep.subr.bf16.mxu0 0
        %2605 = vmatpush1.bf16.msra.mxu0 0
        %2606 = vmatprep.subr.bf16.mxu0 0
        %2607 = vmatpush1.bf16.msra.mxu0 0
        %2608 = vmatprep.subr.bf16.mxu0 0
        %2609 = vmatpush1.bf16.msra.mxu0 0
        %2610 = vmatprep.subr.bf16.mxu0 0
        %2611 = vmatpush1.bf16.msra.mxu0 0
        %2612 = vmatprep.subr.bf16.mxu0 0
        %2613 = vmatpush1.bf16.msra.mxu0 0
        %2614 = vmatprep.subr.bf16.mxu0 0
        %2615 = vmatpush1.bf16.msra.mxu0 0
        %2616 = vmatprep.subr.bf16.mxu0 0
        %2617 = vmatpush1.bf16.msra.mxu0 0
        %2618 = vmatprep.mubr.bf16.mxu0 0
        %2619 = vmatmul.mubr.bf16.gmra.mrb[0].mxu0 %v2575
        %v2620 = vpop.f32.mrb[0].mxu0
        %v2621 = vadd.f32 %v2517, %v2620
        %v2622 = vpop.f32.mrb[0].mxu0
        %v2623 = vpop.f32.mrb[0].mxu0
        %v2624 = vadd.f32 %v2522, %v2623
        %v2625 = vpop.f32.mrb[0].mxu0
        %2626 = vmatprep.mubr.bf16.mxu0 0
        %2627 = vmatmul.mubr.bf16.gmra.mrb[0].mxu0 %v2578
        %v2628 = vpop.f32.mrb[0].mxu0
        %v2629 = vadd.f32 %v2527, %v2628
        %v2630 = vpop.f32.mrb[0].mxu0
        %v2631 = vpop.f32.mrb[0].mxu0
        %v2632 = vadd.f32 %v2532, %v2631
        %v2633 = vpop.f32.mrb[0].mxu0
        %2634 = vmatprep.mubr.bf16.mxu0 0
        %2635 = vmatmul.mubr.bf16.gmra.mrb[0].mxu0 %v2581
        %v2636 = vpop.f32.mrb[0].mxu0
        %v2637 = vadd.f32 %v2537, %v2636
        %v2638 = vpop.f32.mrb[0].mxu0
        %v2639 = vpop.f32.mrb[0].mxu0
        %v2640 = vadd.f32 %v2542, %v2639
        %v2641 = vpop.f32.mrb[0].mxu0
        %2642 = vmatprep.mubr.bf16.mxu0 0
        %2643 = vmatmul.mubr.bf16.gmra.mrb[0].mxu0 %v2584
        %v2644 = vpop.f32.mrb[0].mxu0
        %v2645 = vadd.f32 %v2547, %v2644
        %v2646 = vpop.f32.mrb[0].mxu0
        %v2647 = vpop.f32.mrb[0].mxu0
        %v2648 = vadd.f32 %v2552, %v2647
        %v2649 = vpop.f32.mrb[0].mxu0
        %2650 = vdwg.mxu0
        %2651 = vadd.xlane.f32.xlu0 %v2621
        %v2652 = vpop.xlane.xlu0 %2651
        %2653 = vadd.xlane.f32.xlu0 %v2624
        %v2654 = vpop.xlane.xlu0 %2653
        %2655 = vadd.xlane.f32.xlu0 %v2629
        %v2656 = vpop.xlane.xlu0 %2655
        %2657 = vadd.xlane.f32.xlu0 %v2632
        %v2658 = vpop.xlane.xlu0 %2657
        %2659 = vadd.xlane.f32.xlu0 %v2637
        %v2660 = vpop.xlane.xlu0 %2659
        %2661 = vadd.xlane.f32.xlu0 %v2640
        %v2662 = vpop.xlane.xlu0 %2661
        %2663 = vadd.xlane.f32.xlu0 %v2645
        %v2664 = vpop.xlane.xlu0 %2663
        %2665 = vadd.xlane.f32.xlu0 %v2648
        %v2666 = vpop.xlane.xlu0 %2665
        %v2667 = vmul.f32 %v2652, 0.0078125
        %v2668 = vmul.f32 %v2654, 0.0078125
        %v2669 = vmul.f32 %v2656, 0.0078125
        %v2670 = vmul.f32 %v2658, 0.0078125
        %v2671 = vmul.f32 %v2660, 0.0078125
        %v2672 = vmul.f32 %v2662, 0.0078125
        %v2673 = vmul.f32 %v2664, 0.0078125
        %v2674 = vmul.f32 %v2666, 0.0078125
        %v2675 = vmul.f32 %v2621, %v2621
        %v2676 = vmul.f32 %v2624, %v2624
        %v2677 = vmul.f32 %v2629, %v2629
        %v2678 = vmul.f32 %v2632, %v2632
        %v2679 = vmul.f32 %v2637, %v2637
        %v2680 = vmul.f32 %v2640, %v2640
        %v2681 = vmul.f32 %v2645, %v2645
        %v2682 = vmul.f32 %v2648, %v2648
        %2683 = vadd.xlane.f32.xlu0 %v2675
        %v2684 = vpop.xlane.xlu0 %2683
        %2685 = vadd.xlane.f32.xlu0 %v2676
        %v2686 = vpop.xlane.xlu0 %2685
        %2687 = vadd.xlane.f32.xlu0 %v2677
        %v2688 = vpop.xlane.xlu0 %2687
        %2689 = vadd.xlane.f32.xlu0 %v2678
        %v2690 = vpop.xlane.xlu0 %2689
        %2691 = vadd.xlane.f32.xlu0 %v2679
        %v2692 = vpop.xlane.xlu0 %2691
        %2693 = vadd.xlane.f32.xlu0 %v2680
        %v2694 = vpop.xlane.xlu0 %2693
        %2695 = vadd.xlane.f32.xlu0 %v2681
        %v2696 = vpop.xlane.xlu0 %2695
        %2697 = vadd.xlane.f32.xlu0 %v2682
        %v2698 = vpop.xlane.xlu0 %2697
        %v2699 = vmul.f32 %v2684, 0.0078125
        %v2700 = vmul.f32 %v2686, 0.0078125
        %v2701 = vmul.f32 %v2688, 0.0078125
        %v2702 = vmul.f32 %v2690, 0.0078125
        %v2703 = vmul.f32 %v2692, 0.0078125
        %v2704 = vmul.f32 %v2694, 0.0078125
        %v2705 = vmul.f32 %v2696, 0.0078125
        %v2706 = vmul.f32 %v2698, 0.0078125
        %v2707 = vmul.f32 %v2667, %v2667
        %v2708 = vmul.f32 %v2668, %v2668
        %v2709 = vmul.f32 %v2669, %v2669
        %v2710 = vmul.f32 %v2670, %v2670
        %v2711 = vmul.f32 %v2671, %v2671
        %v2712 = vmul.f32 %v2672, %v2672
        %v2713 = vmul.f32 %v2673, %v2673
        %v2714 = vmul.f32 %v2674, %v2674
        %v2715 = vsub.f32 %v2699, %v2707
        %v2716 = vsub.f32 %v2700, %v2708
        %v2717 = vsub.f32 %v2701, %v2709
        %v2718 = vsub.f32 %v2702, %v2710
        %v2719 = vsub.f32 %v2703, %v2711
        %v2720 = vsub.f32 %v2704, %v2712
        %v2721 = vsub.f32 %v2705, %v2713
        %v2722 = vsub.f32 %v2706, %v2714
        %v2723 = vmax.f32 %v2715, 0.0
        %v2724 = vmax.f32 %v2716, 0.0
        %v2725 = vmax.f32 %v2717, 0.0
        %v2726 = vmax.f32 %v2718, 0.0
        %v2727 = vmax.f32 %v2719, 0.0
        %v2728 = vmax.f32 %v2720, 0.0
        %v2729 = vmax.f32 %v2721, 0.0
        %v2730 = vmax.f32 %v2722, 0.0
        %v2731 = vsub.f32 %v2621, %v2667
        %v2732 = vsub.f32 %v2624, %v2668
        %v2733 = vsub.f32 %v2629, %v2669
        %v2734 = vsub.f32 %v2632, %v2670
        %v2735 = vsub.f32 %v2637, %v2671
        %v2736 = vsub.f32 %v2640, %v2672
        %v2737 = vsub.f32 %v2645, %v2673
        %v2738 = vsub.f32 %v2648, %v2674
        %v2739 = vadd.f32 %v2723, 1e-05
        %v2740 = vadd.f32 %v2724, 1e-05
        %v2741 = vadd.f32 %v2725, 1e-05
        %v2742 = vadd.f32 %v2726, 1e-05
        %v2743 = vadd.f32 %v2727, 1e-05
        %v2744 = vadd.f32 %v2728, 1e-05
        %v2745 = vadd.f32 %v2729, 1e-05
        %v2746 = vadd.f32 %v2730, 1e-05
        %v2747 = vrsqrt.pop %v2739
        %v2748 = vrsqrt.pop %v2740
        %v2749 = vrsqrt.pop %v2741
        %v2750 = vrsqrt.pop %v2742
        %v2751 = vrsqrt.pop %v2743
        %v2752 = vrsqrt.pop %v2744
        %v2753 = vrsqrt.pop %v2745
        %v2754 = vrsqrt.pop %v2746
        %v2755 = vmul.f32 %v2731, %v2747
        %v2756 = vmul.f32 %v2732, %v2748
        %v2757 = vmul.f32 %v2733, %v2749
        %v2758 = vmul.f32 %v2734, %v2750
        %v2759 = vmul.f32 %v2735, %v2751
        %v2760 = vmul.f32 %v2736, %v2752
        %v2761 = vmul.f32 %v2737, %v2753
        %v2762 = vmul.f32 %v2738, %v2754
        %v2763 = vmax.f32 %v2755, 0.0
        %v2764 = vmax.f32 %v2756, 0.0
        %v2765 = vmax.f32 %v2757, 0.0
        %v2766 = vmax.f32 %v2758, 0.0
        %v2767 = vmax.f32 %v2759, 0.0
        %v2768 = vmax.f32 %v2760, 0.0
        %v2769 = vmax.f32 %v2761, 0.0
        %v2770 = vmax.f32 %v2762, 0.0
        %v2771 = vpack.c.bf16 %v2764, %v2763
        %v2772 = vpack.c.bf16 %v2766, %v2765
        %v2773 = vpack.c.bf16 %v2768, %v2767
        %v2774 = vpack.c.bf16 %v2770, %v2769
        %2776 = vset.pattern.permute.xlu0 0
        %2777 = vperm.xlu0 %2776, %v288
        %v2778 = vpop.permute.xlu0 %2777
        %2781 = vset.pattern.permute.xlu0 0
        %2782 = vperm.xlu0 %2781, %v289
        %v2783 = vpop.permute.xlu0 %2782
        %2786 = vset.pattern.permute.xlu0 0
        %2787 = vperm.xlu0 %2786, %v290
        %v2788 = vpop.permute.xlu0 %2787
        %2791 = vset.pattern.permute.xlu0 0
        %2792 = vperm.xlu0 %2791, %v291
        %v2793 = vpop.permute.xlu0 %2792
        %v2799 = vunpack.c.l.b16 %v264
        %v2800 = vunpack.c.l.b16 %v265
        %v2801 = vunpack.c.l.b16 %v266
        %v2802 = vunpack.c.l.b16 %v267
        %v2803 = vpack.c.b16 %v2800, %v2799
        %v2804 = vpack.c.b16 %v2802, %v2801
        %v2806 = vsel %vm1121, %v2803, 0
        %v2809 = vsel %vm1121, %v2804, 0
        %2811 = vmatprep.subr.bf16.mxu0 0
        %2812 = vmatpush1.bf16.msra.mxu0 %v2771
        %2813 = vmatprep.subr.bf16.mxu0 0
        %2814 = vmatpush1.bf16.msra.mxu0 %v2772
        %2815 = vmatprep.subr.bf16.mxu0 0
        %2816 = vmatpush1.bf16.msra.mxu0 %v2773
        %2817 = vmatprep.subr.bf16.mxu0 0
        %2818 = vmatpush1.bf16.msra.mxu0 %v2774
        %2819 = vmatprep.subr.bf16.mxu0 0
        %2820 = vmatpush1.bf16.msra.mxu0 0
        %2821 = vmatprep.subr.bf16.mxu0 0
        %2822 = vmatpush1.bf16.msra.mxu0 0
        %2823 = vmatprep.subr.bf16.mxu0 0
        %2824 = vmatpush1.bf16.msra.mxu0 0
        %2825 = vmatprep.subr.bf16.mxu0 0
        %2826 = vmatpush1.bf16.msra.mxu0 0
        %2827 = vmatprep.subr.bf16.mxu0 0
        %2828 = vmatpush1.bf16.msra.mxu0 0
        %2829 = vmatprep.subr.bf16.mxu0 0
        %2830 = vmatpush1.bf16.msra.mxu0 0
        %2831 = vmatprep.subr.bf16.mxu0 0
        %2832 = vmatpush1.bf16.msra.mxu0 0
        %2833 = vmatprep.subr.bf16.mxu0 0
        %2834 = vmatpush1.bf16.msra.mxu0 0
        %2835 = vmatprep.subr.bf16.mxu0 0
        %2836 = vmatpush1.bf16.msra.mxu0 0
        %2837 = vmatprep.subr.bf16.mxu0 0
        %2838 = vmatpush1.bf16.msra.mxu0 0
        %2839 = vmatprep.subr.bf16.mxu0 0
        %2840 = vmatpush1.bf16.msra.mxu0 0
        %2841 = vmatprep.subr.bf16.mxu0 0
        %2842 = vmatpush1.bf16.msra.mxu0 0
        %2843 = vmatprep.mubr.bf16.mxu0 0
        %2844 = vmatmul.mubr.bf16.gmra.mrb[0].mxu0 %v2806
        %v2845 = vpop.f32.mrb[0].mxu0
        %v2846 = vadd.f32 %v2778, %v2845
        %v2847 = vpop.f32.mrb[0].mxu0
        %v2848 = vpop.f32.mrb[0].mxu0
        %v2849 = vadd.f32 %v2783, %v2848
        %v2850 = vpop.f32.mrb[0].mxu0
        %2851 = vmatprep.mubr.bf16.mxu0 0
        %2852 = vmatmul.mubr.bf16.gmra.mrb[0].mxu0 %v2809
        %v2853 = vpop.f32.mrb[0].mxu0
        %v2854 = vadd.f32 %v2788, %v2853
        %v2855 = vpop.f32.mrb[0].mxu0
        %v2856 = vpop.f32.mrb[0].mxu0
        %v2857 = vadd.f32 %v2793, %v2856
        %v2858 = vpop.f32.mrb[0].mxu0
        %2859 = vdwg.mxu0
        %2860 = vst [vmem:[%s232] sm:$0xff] %v2846
        %2861 = vst [vmem:[%s232 + $0x8] sm:$0xff] %v2849
        %2862 = vst [vmem:[%s232 + $0x10] sm:$0xff] %v2854
        %2863 = vst [vmem:[%s232 + $0x18] sm:$0xff] %v2857
        %s2864 = sand.u32 %s142, 1
        %s2865 = scalar_lea.sflag [#allocation3], %s2864
        %s2866 = sand.u32 %s142, 1
        %s2867 = smul.addr %s2866, 32
        %s2868 = scalar_lea.vmem [#allocation2], %s2867
        // Predicated region
        $region41: #{tpu_custom_call.1} parent=39 // pred_check
          %p2869 = pneg %p152
        $region42: #{tpu_custom_call.1} parent=39 // pred_check_branch
          %2871 = sbr.rel (%p2869) target = $region44
        $region43: #{tpu_custom_call.1} parent=39 // pred_region
          %s2873 = ssub.s32 512, 512
          %2874 = vsyncadd %s2865, %s2873
          %s2875 = smul.addr %s19, 4
          %s2876 = smul.addr %s2875, 128
          %s2877 = scalar_lea.hbm %s5, %s2876
          %s2878 = sshll.u32 %s2868, 4
          %s2879 = int_to_ptr.vmem [resolvable:$true] %s2878
          %2884 = dma.vmem_to_hbm [thread:$0]  %s2879, 512, %s2877, %s2865, 128, 128, 8
        $region44: #{tpu_custom_call.1} parent=39 // pred_fallthru
          _
      $region40: #{tpu_custom_call.1} parent=5 // pred_fallthru
        _
      %p2885 = scmp.le.s32.totalorder 2, %s14
      // Predicated region
      $region45: #{tpu_custom_call.1} parent=5 // pred_check
        %p2886 = pneg %p2885
      $region46: #{tpu_custom_call.1} parent=5 // pred_check_branch
        %2888 = sbr.rel (%p2886) target = $region48
      $region47: #{tpu_custom_call.1} parent=5 // pred_region
        %s2889 = ssub.s32 %s14, 2
        // Predicated region
        $region49: #{tpu_custom_call.1} parent=47 // pred_check
          %p2890 = pneg %p158
        $region50: #{tpu_custom_call.1} parent=47 // pred_check_branch
          %2892 = sbr.rel (%p2890) target = $region52
        $region51: #{tpu_custom_call.1} parent=47 // pred_region
          %s2893 = sand.u32 %s143, 1
          %s2894 = scalar_lea.sflag [#allocation3], %s2893
          %s2895 = sand.u32 %s143, 1
          %s2896 = smul.addr %s2895, 32
          %s2897 = scalar_lea.vmem [#allocation2], %s2896
          %2898 = dma.done %s2894, 512
        $region52: #{tpu_custom_call.1} parent=47 // pred_fallthru
          _
      $region48: #{tpu_custom_call.1} parent=5 // pred_fallthru
        _
    $region6: #{tpu_custom_call.1} parent=1 // loop_footer
      %s18 = sadd.s32 1, %s14
    $region7: #{tpu_custom_call.1} parent=1 // loop_footer_branch
      %13 = sbr.rel target = $region3
    $region8: #{tpu_custom_call.1} parent=1 // loop_exit
      _
    %2899 = vsyncpa [#allocation3], 1
    %s2900 = scalar_lea.sflag [#allocation3], 1
    %2901 = vsyncpa %s2900, 1

</llo_original>
